<compile_context>
chip_gen: v6e
topology: v6e:2x2x1
jax: 0.10.0
libtpu: 0.0.40
codegen_flags: <defaults>
</compile_context>

<pallas_src>
import functools
import math

import jax
import jax.numpy as jnp
from jax.experimental import pallas as pl
from jax.experimental.pallas import tpu as pltpu


# --------------------------- small generic helpers --------------------------

def _round_up(a, b):
    return ((a + b - 1) // b) * b


@functools.lru_cache(maxsize=None)
def _vmem_limit_bytes():
    """Generation-aware scoped-VMEM limit: 75% of physical, capped at 100 MiB."""
    cap = 64 * 1024 * 1024
    try:
        info = pltpu.get_tpu_info()
        cap = int(getattr(info, "vmem_capacity_bytes", cap)) or cap
    except Exception:
        pass
    return int(min(100 * 1024 * 1024, int(0.75 * cap)))


def _spec_buffered(block_shape, index_map, count):
    """BlockSpec with a `count`-deep pipeline if this JAX exposes pl.Buffered."""
    if hasattr(pl, "Buffered"):
        try:
            return pl.BlockSpec(block_shape, index_map,
                                pipeline_mode=pl.Buffered(count))
        except TypeError:
            pass
    return pl.BlockSpec(block_shape, index_map)


def _layernorm(x, g, b, eps=1e-5):
    # x: (T, C), g/b: (1, C)   -- PyTorch LayerNorm (biased variance, eps=1e-5)
    mu = jnp.mean(x, axis=-1, keepdims=True)
    var = jnp.mean((x - mu) ** 2, axis=-1, keepdims=True)
    return (x - mu) * jax.lax.rsqrt(var + eps) * g + b


def _gelu_exact(x):
    # nn.GELU() default (erf form), f32
    return 0.5 * x * (1.0 + jax.lax.erf(x * 0.7071067811865476))


# ----------------- fused transformer stack (all layers, one call) -----------

def gpt_blocks_kernel(x_ref, ln1g_ref, ln1b_ref,
                      wqkv_ref, bqkv_ref, wproj_ref, bproj_ref,
                      ln2g_ref, ln2b_ref,
                      wfc_ref, bfc_ref, wout_ref, bout_ref,
                      o_ref, res_ref, *, n_head):
    f32 = jnp.float32
    bf16 = jnp.bfloat16

    l = pl.program_id(1)
    n_layer = pl.num_programs(1)

    # Residual stream lives in VMEM scratch across the layer axis.
    @pl.when(l == 0)
    def _():
        res_ref[...] = x_ref[0]

    x = res_ref[...]                              # (T, C) f32 residual
    T, C = x.shape
    hd = C // n_head

    # ---- attention branch: x + proj(attn(ln_1(x))) ----
    # (1/sqrt(hd) already folded into the q columns of w_qkv / b_qkv.)
    xn = _layernorm(x, ln1g_ref[0], ln1b_ref[0])                     # f32
    qkv = jnp.dot(xn.astype(bf16), wqkv_ref[0],
                  preferred_element_type=f32) + bqkv_ref[0]          # (T, 3C)

    q = qkv[:, :C]
    k = qkv[:, C:2 * C]
    v = qkv[:, 2 * C:]

    # (T, C) -> (n_head, T, hd); heads batched through a single einsum.
    q3 = jnp.swapaxes(q.reshape(T, n_head, hd), 0, 1).astype(bf16)
    k3 = jnp.swapaxes(k.reshape(T, n_head, hd), 0, 1).astype(bf16)
    v3 = jnp.swapaxes(v.reshape(T, n_head, hd), 0, 1).astype(bf16)

    s = jnp.einsum('htd,hsd->hts', q3, k3,
                   preferred_element_type=f32)                       # (H, T, T)
    row = jax.lax.broadcasted_iota(jnp.int32, (T, T), 0)
    col = jax.lax.broadcasted_iota(jnp.int32, (T, T), 1)
    s = jnp.where((row >= col)[None, :, :], s, -jnp.inf)
    s = s - jnp.max(s, axis=-1, keepdims=True)
    p = jnp.exp(s)
    p = p * pl.reciprocal(jnp.sum(p, axis=-1, keepdims=True), approx=True)

    y3 = jnp.einsum('hts,hsd->htd', p.astype(bf16), v3,
                    preferred_element_type=f32)                      # (H, T, hd)
    y = jnp.swapaxes(y3, 0, 1).reshape(T, C)                         # (T, C)
    y = jnp.dot(y.astype(bf16), wproj_ref[0],
                preferred_element_type=f32) + bproj_ref[0]
    x = x + y

    # ---- MLP branch: x + W2(gelu(W1(ln_2(x)))) ----
    xn2 = _layernorm(x, ln2g_ref[0], ln2b_ref[0])
    h1 = jnp.dot(xn2.astype(bf16), wfc_ref[0],
                 preferred_element_type=f32) + bfc_ref[0]
    h1 = _gelu_exact(h1)                                             # f32
    x = x + jnp.dot(h1.astype(bf16), wout_ref[0],
                    preferred_element_type=f32) + bout_ref[0]

    res_ref[...] = x

    @pl.when(l == n_layer - 1)
    def _():
        o_ref[0] = x


def make_blocks_call(B, T, C, L, n_head):
    hidden = 4 * C
    kern = functools.partial(gpt_blocks_kernel, n_head=n_head)

    def lstack(shape):
        # per-layer stacked parameter (L, *shape): stream one layer per step
        block = (1,) + shape
        zeros = (0,) * len(shape)
        return pl.BlockSpec(block, lambda b, l: (l,) + zeros)

    in_specs = [
        pl.BlockSpec((1, T, C), lambda b, l: (b, 0, 0)),   # x (read at l==0)
        lstack((1, C)), lstack((1, C)),                    # ln_1 gamma, beta
        lstack((C, 3 * C)), lstack((1, 3 * C)),            # cmb_attn W (bf16), b
        lstack((C, C)), lstack((1, C)),                    # cmb_proj W (bf16), b
        lstack((1, C)), lstack((1, C)),                    # ln_2 gamma, beta
        lstack((C, hidden)), lstack((1, hidden)),          # mlp fc W (bf16), b
        lstack((hidden, C)), lstack((1, C)),               # mlp out W (bf16), b
    ]
    return pl.pallas_call(
        kern,
        out_shape=jax.ShapeDtypeStruct((B, T, C), jnp.float32),
        grid_spec=pltpu.PrefetchScalarGridSpec(
            num_scalar_prefetch=0,
            grid=(B, L),                                   # batch outer, layer inner
            in_specs=in_specs,
            out_specs=pl.BlockSpec((1, T, C), lambda b, l: (b, 0, 0)),
            scratch_shapes=[pltpu.VMEM((T, C), jnp.float32)],   # residual
        ),
        compiler_params=pltpu.CompilerParams(
            dimension_semantics=("parallel", "arbitrary"),
            vmem_limit_bytes=_vmem_limit_bytes()),
    )


# ----------------------- final LayerNorm + tied lm_head ---------------------

def _vocab_tiling(V, C):
    """Vocab tile (multiple of 256, ~2 MiB bf16 per slab) and padded vocab."""
    rows = max(256, ((2 * 1024 * 1024) // max(2 * C, 1)) // 256 * 256)
    rows = min(rows, 8192)
    v_pad = _round_up(V, 256)
    if v_pad <= rows:
        return v_pad, v_pad
    return rows, _round_up(V, rows)


def head_kernel(xn_ref, wte_ref, o_ref):
    # xn_ref: (B, C) bf16 pre-normalized last-token acts (constant across grid)
    # wte_ref: (TV, C) bf16 vocab tile; contract on C (last dim of BOTH
    # operands) -> no wte transpose is ever materialised.
    o_ref[...] = jax.lax.dot_general(
        xn_ref[...], wte_ref[...],
        (((1,), (1,)), ((), ())),
        preferred_element_type=jnp.float32)


def lm_head_call(x_last, lnf_g, lnf_b, wte_pad_bf16, tv, vocab_size):
    B, C = x_last.shape
    v_pad = wte_pad_bf16.shape[0]
    n_tiles = v_pad // tv

    # Final LayerNorm + bf16 cast hoisted out of the per-vocab-tile grid:
    # it's a tiny (B, C) op, done once, so the kernel is pure wte streaming.
    xn = _layernorm(x_last, lnf_g, lnf_b).astype(jnp.bfloat16)

    wte_spec = (_spec_buffered((tv, C), lambda j: (j, 0), 3)
                if n_tiles >= 3 else pl.BlockSpec((tv, C), lambda j: (j, 0)))

    logits_pad = pl.pallas_call(
        head_kernel,
        out_shape=jax.ShapeDtypeStruct((B, v_pad), jnp.float32),
        grid=(n_tiles,),
        in_specs=[
            pl.BlockSpec((B, C), lambda j: (0, 0)),
            wte_spec,                                       # stream vocab tiles
        ],
        out_specs=pl.BlockSpec((B, tv), lambda j: (0, j)),  # lane-dense stores
        compiler_params=pltpu.CompilerParams(
            dimension_semantics=("parallel",),
            vmem_limit_bytes=_vmem_limit_bytes()),
    )(xn, wte_pad_bf16)
    return logits_pad[:, :vocab_size]


# ------------------------------ parameter init ------------------------------

def init_params(key, vocab_size, block_size, n_layer, n_embd):
    std = 0.02
    proj_std = 0.02 / math.sqrt(2 * n_layer)
    keys = jax.random.split(key, 2 + n_layer)
    f32 = jnp.float32

    params = {
        "wte": jax.random.normal(keys[0], (vocab_size, n_embd), f32) * std,
        "wpe": jax.random.normal(keys[1], (block_size, n_embd), f32) * std,
        "lnf_g": jnp.ones((1, n_embd), f32),
        "lnf_b": jnp.zeros((1, n_embd), f32),
        "blocks": [],
    }
    for l in range(n_layer):
        k = jax.random.split(keys[2 + l], 4)
        params["blocks"].append({
            "ln1_g": jnp.ones((1, n_embd), f32),
            "ln1_b": jnp.zeros((1, n_embd), f32),
            "w_qkv": jax.random.normal(k[0], (n_embd, 3 * n_embd), f32) * std,
            "b_qkv": jnp.zeros((1, 3 * n_embd), f32),
            "w_proj": jax.random.normal(k[1], (n_embd, n_embd), f32) * proj_std,
            "b_proj": jnp.zeros((1, n_embd), f32),
            "ln2_g": jnp.ones((1, n_embd), f32),
            "ln2_b": jnp.zeros((1, n_embd), f32),
            "w_fc": jax.random.normal(k[2], (n_embd, 4 * n_embd), f32) * std,
            "b_fc": jnp.zeros((1, 4 * n_embd), f32),
            "w_out": jax.random.normal(k[3], (4 * n_embd, n_embd), f32) * std,
            "b_out": jnp.zeros((1, n_embd), f32),
        })
    return params


def prepare_params(params, n_head):
    """One-time host-side prep: stack per-layer weights along L, cast matmul
    weights to bf16 (MXU operand dtype), fold 1/sqrt(hd) into the q columns
    of W_qkv/b_qkv, and pad the tied lm_head weight to a 256-multiple vocab.
    Biases, LayerNorm params and the embedding gather table stay f32."""
    bf16 = jnp.bfloat16
    V, C = params["wte"].shape
    hd = C // n_head
    scale = 1.0 / math.sqrt(hd)
    tv, v_pad = _vocab_tiling(V, C)

    wte_bf = params["wte"].astype(bf16)
    if v_pad > V:
        wte_bf = jnp.concatenate(
            [wte_bf, jnp.zeros((v_pad - V, C), bf16)], axis=0)

    def stack(name):
        return jnp.stack([blk[name] for blk in params["blocks"]], axis=0)

    # Fold the attention scale into the q slice of the combined qkv projection.
    qscale = jnp.concatenate(
        [jnp.full((C,), scale, jnp.float32), jnp.ones((2 * C,), jnp.float32)])
    w_qkv = stack("w_qkv") * qscale[None, None, :]
    b_qkv = stack("b_qkv") * qscale[None, None, :]

    return {
        "wte": params["wte"],                  # f32, embedding gather
        "wte_bf16_pad": wte_bf,                # (V_pad, C) bf16, lm_head operand
        "wpe": params["wpe"],
        "lnf_g": params["lnf_g"], "lnf_b": params["lnf_b"],
        "vocab_size": V, "lm_tv": tv,
        "ln1_g": stack("ln1_g"), "ln1_b": stack("ln1_b"),
        "w_qkv": w_qkv.astype(bf16), "b_qkv": b_qkv,
        "w_proj": stack("w_proj").astype(bf16), "b_proj": stack("b_proj"),
        "ln2_g": stack("ln2_g"), "ln2_b": stack("ln2_b"),
        "w_fc": stack("w_fc").astype(bf16), "b_fc": stack("b_fc"),
        "w_out": stack("w_out").astype(bf16), "b_out": stack("b_out"),
    }


# ------------------------------ full forward --------------------------------

def gpt_forward(idx, fast, n_head):
    """idx: int32 [B, T] token ids -> logits float32 [B, 1, vocab_size]."""
    B, T = idx.shape
    C = fast["wte"].shape[1]
    L = fast["w_qkv"].shape[0]

    # Embedding gathers + positional add are glue (plain JAX); dropout p=0.
    x = fast["wte"][idx] + fast["wpe"][:T][None, :, :]            # (B, T, C)

    blocks_call = make_blocks_call(B, T, C, L, n_head)
    x = blocks_call(x,
                    fast["ln1_g"], fast["ln1_b"],
                    fast["w_qkv"], fast["b_qkv"],
                    fast["w_proj"], fast["b_proj"],
                    fast["ln2_g"], fast["ln2_b"],
                    fast["w_fc"], fast["b_fc"],
                    fast["w_out"], fast["b_out"])                 # (B, T, C)

    logits = lm_head_call(x[:, -1, :], fast["lnf_g"], fast["lnf_b"],
                          fast["wte_bf16_pad"], fast["lm_tv"],
                          fast["vocab_size"])                     # tied weights
    return logits[:, None, :]                                     # (B, 1, V)
    # TODO(synk): training path (targets / cross-entropy) and generate() are
    #             not implemented; only the inference (targets=None) forward.


# --------------------------- pure-JAX reference ------------------------------

def _ref_forward(idx, params, n_head):
    hi = jax.lax.Precision.HIGHEST
    B, T = idx.shape
    C = params["wte"].shape[1]
    hd = C // n_head
    x = params["wte"][idx] + params["wpe"][:T][None, :, :]

    def ln(x, g, b):
        mu = x.mean(-1, keepdims=True)
        var = ((x - mu) ** 2).mean(-1, keepdims=True)
        return (x - mu) / jnp.sqrt(var + 1e-5) * g + b

    for blk in params["blocks"]:
        xn = ln(x, blk["ln1_g"], blk["ln1_b"])
        qkv = jnp.einsum("btc,cd->btd", xn, blk["w_qkv"], precision=hi) + blk["b_qkv"]
        q, k, v = jnp.split(qkv, 3, axis=-1)
        q = q.reshape(B, T, n_head, hd).transpose(0, 2, 1, 3)
        k = k.reshape(B, T, n_head, hd).transpose(0, 2, 1, 3)
        v = v.reshape(B, T, n_head, hd).transpose(0, 2, 1, 3)
        s = jnp.einsum("bhtd,bhsd->bhts", q, k, precision=hi) / math.sqrt(hd)
        mask = jnp.tril(jnp.ones((T, T), bool))
        s = jnp.where(mask, s, -jnp.inf)
        p = jax.nn.softmax(s, axis=-1)
        y = jnp.einsum("bhts,bhsd->bhtd", p, v, precision=hi)
        y = y.transpose(0, 2, 1, 3).reshape(B, T, C)
        y = jnp.einsum("btc,cd->btd", y, blk["w_proj"], precision=hi) + blk["b_proj"]
        x = x + y
        xn2 = ln(x, blk["ln2_g"], blk["ln2_b"])
        h = jnp.einsum("btc,cd->btd", xn2, blk["w_fc"], precision=hi) + blk["b_fc"]
        h = jax.nn.gelu(h, approximate=False)
        m = jnp.einsum("btd,dc->btc", h, blk["w_out"], precision=hi) + blk["b_out"]
        x = x + m
    x = ln(x, params["lnf_g"], params["lnf_b"])
    return jnp.einsum("bc,vc->bv", x[:, -1, :], params["wte"], precision=hi)[:, None, :]


# ------------------------------------ main -----------------------------------

if __name__ == "__main__":
    vocab_size = 64
    block_size = 16
    n_layer = 2
    n_head = 2
    n_embd = 32
    B, T = 2, 8

    key = jax.random.PRNGKey(0)
    kp, ki = jax.random.split(key)
    params = init_params(kp, vocab_size, block_size, n_layer, n_embd)
    fast = prepare_params(params, n_head)       # one-time bf16 / stacking prep
    idx = jax.random.randint(ki, (B, T), 0, vocab_size, dtype=jnp.int32)

    logits = gpt_forward(idx, fast, n_head)
    logits = jax.block_until_ready(logits)
    assert logits.shape == (B, 1, vocab_size)

    ref = _ref_forward(idx, params, n_head)
    err = float(jnp.max(jnp.abs(logits - ref)))
    # bf16 matmul inputs + approx reciprocal vs f32-HIGHEST reference
    assert err < 2e-2, f"mismatch vs pure-JAX reference: {err}"

    print("KERNEL_OK")
</pallas_src>

<mosaic_0001>
module attributes {stable_mosaic.version = 11 : i64} {
  func.func @gpt_blocks_kernel(%arg0: i32, %arg1: i32, %arg2: memref<1x8x32xf32, #tpu.memory_space<vmem>>, %arg3: memref<1x1x32xf32, #tpu.memory_space<vmem>>, %arg4: memref<1x1x32xf32, #tpu.memory_space<vmem>>, %arg5: memref<1x32x96xbf16, #tpu.memory_space<vmem>>, %arg6: memref<1x1x96xf32, #tpu.memory_space<vmem>>, %arg7: memref<1x32x32xbf16, #tpu.memory_space<vmem>>, %arg8: memref<1x1x32xf32, #tpu.memory_space<vmem>>, %arg9: memref<1x1x32xf32, #tpu.memory_space<vmem>>, %arg10: memref<1x1x32xf32, #tpu.memory_space<vmem>>, %arg11: memref<1x32x128xbf16, #tpu.memory_space<vmem>>, %arg12: memref<1x1x128xf32, #tpu.memory_space<vmem>>, %arg13: memref<1x128x32xbf16, #tpu.memory_space<vmem>>, %arg14: memref<1x1x32xf32, #tpu.memory_space<vmem>>, %arg15: memref<1x8x32xf32, #tpu.memory_space<vmem>>, %arg16: memref<8x32xf32, #tpu.memory_space<vmem>>) attributes {dimension_semantics = [#tpu.dimension_semantics<parallel>, #tpu.dimension_semantics<arbitrary>], iteration_bounds = array<i64: 2, 2>, scalar_prefetch = 0 : i64, scratch_operands = 1 : i64, tpu.core_type = #tpu.core_type<tc>, window_params = [{transform_indices = @transform_0, window_bounds = array<i64: 1, 8, 32>}, {transform_indices = @transform_1, window_bounds = array<i64: 1, 1, 32>}, {transform_indices = @transform_2, window_bounds = array<i64: 1, 1, 32>}, {transform_indices = @transform_3, window_bounds = array<i64: 1, 32, 96>}, {transform_indices = @transform_4, window_bounds = array<i64: 1, 1, 96>}, {transform_indices = @transform_5, window_bounds = array<i64: 1, 32, 32>}, {transform_indices = @transform_6, window_bounds = array<i64: 1, 1, 32>}, {transform_indices = @transform_7, window_bounds = array<i64: 1, 1, 32>}, {transform_indices = @transform_8, window_bounds = array<i64: 1, 1, 32>}, {transform_indices = @transform_9, window_bounds = array<i64: 1, 32, 128>}, {transform_indices = @transform_10, window_bounds = array<i64: 1, 1, 128>}, {transform_indices = @transform_11, window_bounds = array<i64: 1, 128, 32>}, {transform_indices = @transform_12, window_bounds = array<i64: 1, 1, 32>}, {transform_indices = @transform_13, window_bounds = array<i64: 1, 8, 32>}]} {
    %c0_i32 = arith.constant 0 : i32
    %0 = arith.cmpi eq, %arg1, %c0_i32 : i32
    %1 = arith.extui %0 : i1 to i32
    %c0_i32_0 = arith.constant 0 : i32
    %2 = arith.cmpi ne, %1, %c0_i32_0 : i32
    scf.if %2 {
      %c0_62 = arith.constant 0 : index
      %c0_63 = arith.constant 0 : index
      %c0_64 = arith.constant 0 : index
      %137 = vector.load %arg2[%c0_62, %c0_63, %c0_64] : memref<1x8x32xf32, #tpu.memory_space<vmem>>, vector<1x8x32xf32>
      %138 = vector.shape_cast %137 : vector<1x8x32xf32> to vector<8x32xf32>
      %c0_65 = arith.constant 0 : index
      %c0_66 = arith.constant 0 : index
      %139 = vector.load %arg16[%c0_65, %c0_66] : memref<8x32xf32, #tpu.memory_space<vmem>>, vector<8x32xf32>
      tpu.vector_store %arg16[%c0_65, %c0_66], %138 {strides = array<i32>} : memref<8x32xf32, #tpu.memory_space<vmem>>, vector<8x32xf32>,
    } else {
    }
    %c0 = arith.constant 0 : index
    %c0_1 = arith.constant 0 : index
    %3 = vector.load %arg16[%c0, %c0_1] : memref<8x32xf32, #tpu.memory_space<vmem>>, vector<8x32xf32>
    %c0_2 = arith.constant 0 : index
    %c0_3 = arith.constant 0 : index
    %c0_4 = arith.constant 0 : index
    %4 = vector.load %arg3[%c0_2, %c0_3, %c0_4] : memref<1x1x32xf32, #tpu.memory_space<vmem>>, vector<1x1x32xf32>
    %5 = vector.shape_cast %4 : vector<1x1x32xf32> to vector<1x32xf32>
    %c0_5 = arith.constant 0 : index
    %c0_6 = arith.constant 0 : index
    %c0_7 = arith.constant 0 : index
    %6 = vector.load %arg4[%c0_5, %c0_6, %c0_7] : memref<1x1x32xf32, #tpu.memory_space<vmem>>, vector<1x1x32xf32>
    %7 = vector.shape_cast %6 : vector<1x1x32xf32> to vector<1x32xf32>
    %cst = arith.constant dense<0.000000e+00> : vector<8xf32>
    %8 = vector.multi_reduction <add>, %3, %cst [1] : vector<8x32xf32> to vector<8xf32>
    %9 = vector.shape_cast %8 : vector<8xf32> to vector<8x1xf32>
    %cst_8 = arith.constant 3.200000e+01 : f32
    %10 = vector.broadcast %cst_8 : f32 to vector<8x1xf32>
    %11 = arith.divf %9, %10 : vector<8x1xf32>
    %12 = vector.broadcast %11 : vector<8x1xf32> to vector<8x32xf32>
    %13 = arith.subf %3, %12 : vector<8x32xf32>
    %14 = arith.mulf %13, %13 : vector<8x32xf32>
    %cst_9 = arith.constant dense<0.000000e+00> : vector<8xf32>
    %15 = vector.multi_reduction <add>, %14, %cst_9 [1] : vector<8x32xf32> to vector<8xf32>
    %16 = vector.shape_cast %15 : vector<8xf32> to vector<8x1xf32>
    %cst_10 = arith.constant 3.200000e+01 : f32
    %17 = vector.broadcast %cst_10 : f32 to vector<8x1xf32>
    %18 = arith.divf %16, %17 : vector<8x1xf32>
    %19 = vector.broadcast %11 : vector<8x1xf32> to vector<8x32xf32>
    %20 = arith.subf %3, %19 : vector<8x32xf32>
    %cst_11 = arith.constant 9.99999974E-6 : f32
    %21 = vector.broadcast %cst_11 : f32 to vector<8x1xf32>
    %22 = arith.addf %18, %21 : vector<8x1xf32>
    %23 = math.rsqrt %22 : vector<8x1xf32>
    %24 = vector.broadcast %23 : vector<8x1xf32> to vector<8x32xf32>
    %25 = arith.mulf %20, %24 : vector<8x32xf32>
    %26 = vector.broadcast %5 : vector<1x32xf32> to vector<8x32xf32>
    %27 = arith.mulf %25, %26 : vector<8x32xf32>
    %28 = vector.broadcast %7 : vector<1x32xf32> to vector<8x32xf32>
    %29 = arith.addf %27, %28 : vector<8x32xf32>
    %30 = arith.truncf %29 : vector<8x32xf32> to vector<8x32xbf16>
    %c0_12 = arith.constant 0 : index
    %c0_13 = arith.constant 0 : index
    %c0_14 = arith.constant 0 : index
    %31 = vector.load %arg5[%c0_12, %c0_13, %c0_14] : memref<1x32x96xbf16, #tpu.memory_space<vmem>>, vector<1x32x96xbf16>
    %32 = vector.shape_cast %31 : vector<1x32x96xbf16> to vector<32x96xbf16>
    %cst_15 = arith.constant dense<0.000000e+00> : vector<8x96xf32>
    %33 = tpu.matmul %30, %32, %cst_15 {dimension_numbers = #tpu.dot_dimension_numbers<[1], [0], [0], [1], [0, 0, 1, 1], [], []>} : vector<8x32xbf16>, vector<32x96xbf16>, vector<8x96xf32> -> vector<8x96xf32>
    %c0_16 = arith.constant 0 : index
    %c0_17 = arith.constant 0 : index
    %c0_18 = arith.constant 0 : index
    %34 = vector.load %arg6[%c0_16, %c0_17, %c0_18] : memref<1x1x96xf32, #tpu.memory_space<vmem>>, vector<1x1x96xf32>
    %35 = vector.shape_cast %34 : vector<1x1x96xf32> to vector<1x96xf32>
    %36 = vector.broadcast %35 : vector<1x96xf32> to vector<8x96xf32>
    %37 = arith.addf %33, %36 : vector<8x96xf32>
    %38 = vector.extract_strided_slice %37 {offsets = [0, 0], sizes = [8, 32], strides = [1, 1]} : vector<8x96xf32> to vector<8x32xf32>
    %39 = vector.extract_strided_slice %37 {offsets = [0, 32], sizes = [8, 32], strides = [1, 1]} : vector<8x96xf32> to vector<8x32xf32>
    %40 = vector.extract_strided_slice %37 {offsets = [0, 64], sizes = [8, 32], strides = [1, 1]} : vector<8x96xf32> to vector<8x32xf32>
    %41 = vector.shape_cast %38 : vector<8x32xf32> to vector<8x2x16xf32>
    %42 = tpu.transpose %41, [1, 0, 2] : vector<8x2x16xf32> -> vector<2x8x16xf32>
    %43 = arith.truncf %42 : vector<2x8x16xf32> to vector<2x8x16xbf16>
    %44 = vector.shape_cast %39 : vector<8x32xf32> to vector<8x2x16xf32>
    %45 = tpu.transpose %44, [1, 0, 2] : vector<8x2x16xf32> -> vector<2x8x16xf32>
    %46 = arith.truncf %45 : vector<2x8x16xf32> to vector<2x8x16xbf16>
    %47 = vector.shape_cast %40 : vector<8x32xf32> to vector<8x2x16xf32>
    %48 = tpu.transpose %47, [1, 0, 2] : vector<8x2x16xf32> -> vector<2x8x16xf32>
    %49 = arith.truncf %48 : vector<2x8x16xf32> to vector<2x8x16xbf16>
    "tpu.trace_start"() <{level = 10 : i32, message = "htd,hsd->hts"}> : () -> ()
    %cst_19 = arith.constant dense<0.000000e+00> : vector<2x8x8xf32>
    %50 = tpu.matmul %43, %46, %cst_19 {dimension_numbers = #tpu.dot_dimension_numbers<[2], [2], [1], [1], [0, 0, 0, 1, 1, 1], [0], [0]>} : vector<2x8x16xbf16>, vector<2x8x16xbf16>, vector<2x8x8xf32> -> vector<2x8x8xf32>
    "tpu.trace_stop"() : () -> ()
    %51 = tpu.iota {dimensions = array<i32: 0>} : vector<8x8xi32>
    %52 = tpu.iota {dimensions = array<i32: 1>} : vector<8x8xi32>
    %53 = arith.cmpi sge, %51, %52 : vector<8x8xi32>
    %54 = vector.shape_cast %53 : vector<8x8xi1> to vector<1x8x8xi1>
    %cst_20 = arith.constant 0xFF800000 : f32
    %55 = vector.shape_cast %54 : vector<1x8x8xi1> to vector<1x8x8xi1>
    %56 = vector.broadcast %55 : vector<1x8x8xi1> to vector<2x8x8xi1>
    %57 = vector.broadcast %cst_20 : f32 to vector<2x8x8xf32>
    %58 = arith.select %56, %50, %57 : vector<2x8x8xi1>, vector<2x8x8xf32>
    %cst_21 = arith.constant dense<0xFF800000> : vector<2x8xf32>
    %59 = vector.multi_reduction <maximumf>, %58, %cst_21 [2] : vector<2x8x8xf32> to vector<2x8xf32>
    %60 = vector.shape_cast %59 : vector<2x8xf32> to vector<2x8x1xf32>
    %61 = vector.broadcast %60 : vector<2x8x1xf32> to vector<2x8x8xf32>
    %62 = arith.subf %58, %61 : vector<2x8x8xf32>
    %63 = math.exp %62 : vector<2x8x8xf32>
    %cst_22 = arith.constant dense<0.000000e+00> : vector<2x8xf32>
    %64 = vector.multi_reduction <add>, %63, %cst_22 [2] : vector<2x8x8xf32> to vector<2x8xf32>
    %65 = vector.shape_cast %64 : vector<2x8xf32> to vector<2x8x1xf32>
    %66 = tpu.reciprocal %65 {approx = true} : vector<2x8x1xf32> -> vector<2x8x1xf32>
    %67 = vector.broadcast %66 : vector<2x8x1xf32> to vector<2x8x8xf32>
    %68 = arith.mulf %63, %67 : vector<2x8x8xf32>
    %69 = arith.truncf %68 : vector<2x8x8xf32> to vector<2x8x8xbf16>
    "tpu.trace_start"() <{level = 10 : i32, message = "hts,hsd->htd"}> : () -> ()
    %cst_23 = arith.constant dense<0.000000e+00> : vector<2x8x16xf32>
    %70 = tpu.matmul %69, %49, %cst_23 {dimension_numbers = #tpu.dot_dimension_numbers<[2], [1], [1], [2], [0, 0, 0, 1, 1, 2], [0], [0]>} : vector<2x8x8xbf16>, vector<2x8x16xbf16>, vector<2x8x16xf32> -> vector<2x8x16xf32>
    "tpu.trace_stop"() : () -> ()
    %71 = tpu.transpose %70, [1, 0, 2] : vector<2x8x16xf32> -> vector<8x2x16xf32>
    %72 = vector.shape_cast %71 : vector<8x2x16xf32> to vector<8x32xf32>
    %73 = arith.truncf %72 : vector<8x32xf32> to vector<8x32xbf16>
    %c0_24 = arith.constant 0 : index
    %c0_25 = arith.constant 0 : index
    %c0_26 = arith.constant 0 : index
    %74 = vector.load %arg7[%c0_24, %c0_25, %c0_26] : memref<1x32x32xbf16, #tpu.memory_space<vmem>>, vector<1x32x32xbf16>
    %75 = vector.shape_cast %74 : vector<1x32x32xbf16> to vector<32x32xbf16>
    %cst_27 = arith.constant dense<0.000000e+00> : vector<8x32xf32>
    %76 = tpu.matmul %73, %75, %cst_27 {dimension_numbers = #tpu.dot_dimension_numbers<[1], [0], [0], [1], [0, 0, 1, 1], [], []>} : vector<8x32xbf16>, vector<32x32xbf16>, vector<8x32xf32> -> vector<8x32xf32>
    %c0_28 = arith.constant 0 : index
    %c0_29 = arith.constant 0 : index
    %c0_30 = arith.constant 0 : index
    %77 = vector.load %arg8[%c0_28, %c0_29, %c0_30] : memref<1x1x32xf32, #tpu.memory_space<vmem>>, vector<1x1x32xf32>
    %78 = vector.shape_cast %77 : vector<1x1x32xf32> to vector<1x32xf32>
    %79 = vector.broadcast %78 : vector<1x32xf32> to vector<8x32xf32>
    %80 = arith.addf %76, %79 : vector<8x32xf32>
    %81 = arith.addf %3, %80 : vector<8x32xf32>
    %c0_31 = arith.constant 0 : index
    %c0_32 = arith.constant 0 : index
    %c0_33 = arith.constant 0 : index
    %82 = vector.load %arg9[%c0_31, %c0_32, %c0_33] : memref<1x1x32xf32, #tpu.memory_space<vmem>>, vector<1x1x32xf32>
    %83 = vector.shape_cast %82 : vector<1x1x32xf32> to vector<1x32xf32>
    %c0_34 = arith.constant 0 : index
    %c0_35 = arith.constant 0 : index
    %c0_36 = arith.constant 0 : index
    %84 = vector.load %arg10[%c0_34, %c0_35, %c0_36] : memref<1x1x32xf32, #tpu.memory_space<vmem>>, vector<1x1x32xf32>
    %85 = vector.shape_cast %84 : vector<1x1x32xf32> to vector<1x32xf32>
    %cst_37 = arith.constant dense<0.000000e+00> : vector<8xf32>
    %86 = vector.multi_reduction <add>, %81, %cst_37 [1] : vector<8x32xf32> to vector<8xf32>
    %87 = vector.shape_cast %86 : vector<8xf32> to vector<8x1xf32>
    %cst_38 = arith.constant 3.200000e+01 : f32
    %88 = vector.broadcast %cst_38 : f32 to vector<8x1xf32>
    %89 = arith.divf %87, %88 : vector<8x1xf32>
    %90 = vector.broadcast %89 : vector<8x1xf32> to vector<8x32xf32>
    %91 = arith.subf %81, %90 : vector<8x32xf32>
    %92 = arith.mulf %91, %91 : vector<8x32xf32>
    %cst_39 = arith.constant dense<0.000000e+00> : vector<8xf32>
    %93 = vector.multi_reduction <add>, %92, %cst_39 [1] : vector<8x32xf32> to vector<8xf32>
    %94 = vector.shape_cast %93 : vector<8xf32> to vector<8x1xf32>
    %cst_40 = arith.constant 3.200000e+01 : f32
    %95 = vector.broadcast %cst_40 : f32 to vector<8x1xf32>
    %96 = arith.divf %94, %95 : vector<8x1xf32>
    %97 = vector.broadcast %89 : vector<8x1xf32> to vector<8x32xf32>
    %98 = arith.subf %81, %97 : vector<8x32xf32>
    %cst_41 = arith.constant 9.99999974E-6 : f32
    %99 = vector.broadcast %cst_41 : f32 to vector<8x1xf32>
    %100 = arith.addf %96, %99 : vector<8x1xf32>
    %101 = math.rsqrt %100 : vector<8x1xf32>
    %102 = vector.broadcast %101 : vector<8x1xf32> to vector<8x32xf32>
    %103 = arith.mulf %98, %102 : vector<8x32xf32>
    %104 = vector.broadcast %83 : vector<1x32xf32> to vector<8x32xf32>
    %105 = arith.mulf %103, %104 : vector<8x32xf32>
    %106 = vector.broadcast %85 : vector<1x32xf32> to vector<8x32xf32>
    %107 = arith.addf %105, %106 : vector<8x32xf32>
    %108 = arith.truncf %107 : vector<8x32xf32> to vector<8x32xbf16>
    %c0_42 = arith.constant 0 : index
    %c0_43 = arith.constant 0 : index
    %c0_44 = arith.constant 0 : index
    %109 = vector.load %arg11[%c0_42, %c0_43, %c0_44] : memref<1x32x128xbf16, #tpu.memory_space<vmem>>, vector<1x32x128xbf16>
    %110 = vector.shape_cast %109 : vector<1x32x128xbf16> to vector<32x128xbf16>
    %cst_45 = arith.constant dense<0.000000e+00> : vector<8x128xf32>
    %111 = tpu.matmul %108, %110, %cst_45 {dimension_numbers = #tpu.dot_dimension_numbers<[1], [0], [0], [1], [0, 0, 1, 1], [], []>} : vector<8x32xbf16>, vector<32x128xbf16>, vector<8x128xf32> -> vector<8x128xf32>
    %c0_46 = arith.constant 0 : index
    %c0_47 = arith.constant 0 : index
    %c0_48 = arith.constant 0 : index
    %112 = vector.load %arg12[%c0_46, %c0_47, %c0_48] : memref<1x1x128xf32, #tpu.memory_space<vmem>>, vector<1x1x128xf32>
    %113 = vector.shape_cast %112 : vector<1x1x128xf32> to vector<1x128xf32>
    %114 = vector.broadcast %113 : vector<1x128xf32> to vector<8x128xf32>
    %115 = arith.addf %111, %114 : vector<8x128xf32>
    %cst_49 = arith.constant 5.000000e-01 : f32
    %116 = vector.broadcast %cst_49 : f32 to vector<8x128xf32>
    %117 = arith.mulf %116, %115 : vector<8x128xf32>
    %cst_50 = arith.constant 0.707106769 : f32
    %118 = vector.broadcast %cst_50 : f32 to vector<8x128xf32>
    %119 = arith.mulf %115, %118 : vector<8x128xf32>
    %120 = math.erf %119 : vector<8x128xf32>
    %cst_51 = arith.constant 1.000000e+00 : f32
    %121 = vector.broadcast %cst_51 : f32 to vector<8x128xf32>
    %122 = arith.addf %121, %120 : vector<8x128xf32>
    %123 = arith.mulf %117, %122 : vector<8x128xf32>
    %124 = arith.truncf %123 : vector<8x128xf32> to vector<8x128xbf16>
    %c0_52 = arith.constant 0 : index
    %c0_53 = arith.constant 0 : index
    %c0_54 = arith.constant 0 : index
    %125 = vector.load %arg13[%c0_52, %c0_53, %c0_54] : memref<1x128x32xbf16, #tpu.memory_space<vmem>>, vector<1x128x32xbf16>
    %126 = vector.shape_cast %125 : vector<1x128x32xbf16> to vector<128x32xbf16>
    %cst_55 = arith.constant dense<0.000000e+00> : vector<8x32xf32>
    %127 = tpu.matmul %124, %126, %cst_55 {dimension_numbers = #tpu.dot_dimension_numbers<[1], [0], [0], [1], [0, 0, 1, 1], [], []>} : vector<8x128xbf16>, vector<128x32xbf16>, vector<8x32xf32> -> vector<8x32xf32>
    %128 = arith.addf %81, %127 : vector<8x32xf32>
    %c0_56 = arith.constant 0 : index
    %c0_57 = arith.constant 0 : index
    %c0_58 = arith.constant 0 : index
    %129 = vector.load %arg14[%c0_56, %c0_57, %c0_58] : memref<1x1x32xf32, #tpu.memory_space<vmem>>, vector<1x1x32xf32>
    %130 = vector.shape_cast %129 : vector<1x1x32xf32> to vector<1x32xf32>
    %131 = vector.broadcast %130 : vector<1x32xf32> to vector<8x32xf32>
    %132 = arith.addf %128, %131 : vector<8x32xf32>
    %c0_59 = arith.constant 0 : index
    %c0_60 = arith.constant 0 : index
    %133 = vector.load %arg16[%c0_59, %c0_60] : memref<8x32xf32, #tpu.memory_space<vmem>>, vector<8x32xf32>
    tpu.vector_store %arg16[%c0_59, %c0_60], %132 {strides = array<i32>} : memref<8x32xf32, #tpu.memory_space<vmem>>, vector<8x32xf32>,
    %c1_i32 = arith.constant 1 : i32
    %134 = arith.cmpi eq, %arg1, %c1_i32 : i32
    %135 = arith.extui %134 : i1 to i32
    %c0_i32_61 = arith.constant 0 : i32
    %136 = arith.cmpi ne, %135, %c0_i32_61 : i32
    scf.if %136 {
      %c0_62 = arith.constant 0 : index
      %c0_63 = arith.constant 0 : index
      %c0_64 = arith.constant 0 : index
      %137 = vector.load %arg15[%c0_62, %c0_63, %c0_64] : memref<1x8x32xf32, #tpu.memory_space<vmem>>, vector<1x8x32xf32>
      %138 = vector.shape_cast %137 : vector<1x8x32xf32> to vector<8x32xf32>
      %139 = vector.shape_cast %132 : vector<8x32xf32> to vector<1x8x32xf32>
      tpu.vector_store %arg15[%c0_62, %c0_63, %c0_64], %139 {strides = array<i32>} : memref<1x8x32xf32, #tpu.memory_space<vmem>>, vector<1x8x32xf32>,
    } else {
    }
    return
  }
  func.func @transform_0(%arg0: i32, %arg1: i32) -> (i32, i32, i32) {
    %c0_i32 = arith.constant 0 : i32
    %c0_i32_0 = arith.constant 0 : i32
    %c0_i32_1 = arith.constant 0 : i32
    return %arg0, %c0_i32, %c0_i32_0 : i32, i32, i32
  }
  func.func @transform_1(%arg0: i32, %arg1: i32) -> (i32, i32, i32) {
    %c0_i32 = arith.constant 0 : i32
    %c0_i32_0 = arith.constant 0 : i32
    %c0_i32_1 = arith.constant 0 : i32
    return %arg1, %c0_i32, %c0_i32_0 : i32, i32, i32
  }
  func.func @transform_2(%arg0: i32, %arg1: i32) -> (i32, i32, i32) {
    %c0_i32 = arith.constant 0 : i32
    %c0_i32_0 = arith.constant 0 : i32
    %c0_i32_1 = arith.constant 0 : i32
    return %arg1, %c0_i32, %c0_i32_0 : i32, i32, i32
  }
  func.func @transform_3(%arg0: i32, %arg1: i32) -> (i32, i32, i32) {
    %c0_i32 = arith.constant 0 : i32
    %c0_i32_0 = arith.constant 0 : i32
    %c0_i32_1 = arith.constant 0 : i32
    return %arg1, %c0_i32, %c0_i32_0 : i32, i32, i32
  }
  func.func @transform_4(%arg0: i32, %arg1: i32) -> (i32, i32, i32) {
    %c0_i32 = arith.constant 0 : i32
    %c0_i32_0 = arith.constant 0 : i32
    %c0_i32_1 = arith.constant 0 : i32
    return %arg1, %c0_i32, %c0_i32_0 : i32, i32, i32
  }
  func.func @transform_5(%arg0: i32, %arg1: i32) -> (i32, i32, i32) {
    %c0_i32 = arith.constant 0 : i32
    %c0_i32_0 = arith.constant 0 : i32
    %c0_i32_1 = arith.constant 0 : i32
    return %arg1, %c0_i32, %c0_i32_0 : i32, i32, i32
  }
  func.func @transform_6(%arg0: i32, %arg1: i32) -> (i32, i32, i32) {
    %c0_i32 = arith.constant 0 : i32
    %c0_i32_0 = arith.constant 0 : i32
    %c0_i32_1 = arith.constant 0 : i32
    return %arg1, %c0_i32, %c0_i32_0 : i32, i32, i32
  }
  func.func @transform_7(%arg0: i32, %arg1: i32) -> (i32, i32, i32) {
    %c0_i32 = arith.constant 0 : i32
    %c0_i32_0 = arith.constant 0 : i32
    %c0_i32_1 = arith.constant 0 : i32
    return %arg1, %c0_i32, %c0_i32_0 : i32, i32, i32
  }
  func.func @transform_8(%arg0: i32, %arg1: i32) -> (i32, i32, i32) {
    %c0_i32 = arith.constant 0 : i32
    %c0_i32_0 = arith.constant 0 : i32
    %c0_i32_1 = arith.constant 0 : i32
    return %arg1, %c0_i32, %c0_i32_0 : i32, i32, i32
  }
  func.func @transform_9(%arg0: i32, %arg1: i32) -> (i32, i32, i32) {
    %c0_i32 = arith.constant 0 : i32
    %c0_i32_0 = arith.constant 0 : i32
    %c0_i32_1 = arith.constant 0 : i32
    return %arg1, %c0_i32, %c0_i32_0 : i32, i32, i32
  }
  func.func @transform_10(%arg0: i32, %arg1: i32) -> (i32, i32, i32) {
    %c0_i32 = arith.constant 0 : i32
    %c0_i32_0 = arith.constant 0 : i32
    %c0_i32_1 = arith.constant 0 : i32
    return %arg1, %c0_i32, %c0_i32_0 : i32, i32, i32
  }
  func.func @transform_11(%arg0: i32, %arg1: i32) -> (i32, i32, i32) {
    %c0_i32 = arith.constant 0 : i32
    %c0_i32_0 = arith.constant 0 : i32
    %c0_i32_1 = arith.constant 0 : i32
    return %arg1, %c0_i32, %c0_i32_0 : i32, i32, i32
  }
  func.func @transform_12(%arg0: i32, %arg1: i32) -> (i32, i32, i32) {
    %c0_i32 = arith.constant 0 : i32
    %c0_i32_0 = arith.constant 0 : i32
    %c0_i32_1 = arith.constant 0 : i32
    return %arg1, %c0_i32, %c0_i32_0 : i32, i32, i32
  }
  func.func @transform_13(%arg0: i32, %arg1: i32) -> (i32, i32, i32) {
    %c0_i32 = arith.constant 0 : i32
    %c0_i32_0 = arith.constant 0 : i32
    %c0_i32_1 = arith.constant 0 : i32
    return %arg0, %c0_i32, %c0_i32_0 : i32, i32, i32
  }
}

</mosaic_0001>

<llo_original>
// kernel: tpu_custom_call.1
$region0: #{tpu_custom_call.1}
  #allocation0 [shape = 'u32[]', space=smem, size = 0x4, offset = 0x4, fixed_abs, tag = 'smem constant byte address 0x4 - core index']
  #allocation1 [shape = 'u32[144,128]{1,0:T(1,128)}', space=vmem, size = 0x12000, scoped, tag = 'internal scratch']
  #allocation2 [shape = 'f32[8,32]{1,0:T(8,128)}', space=vmem, size = 0x1000, scoped, tag = 'scratch operand']
  %s0 = inlined_call_operand.vmem [shape: f32[2,8,32], index: 0, kind: input, shape index: {}]
  %s1 = inlined_call_operand.vmem [shape: f32[2,1,32], index: 1, kind: input, shape index: {}]
  %s2 = inlined_call_operand.vmem [shape: f32[2,1,32], index: 2, kind: input, shape index: {}]
  %s3 = inlined_call_operand.vmem [shape: bf16[2,32,96], index: 3, kind: input, shape index: {}]
  %s4 = inlined_call_operand.vmem [shape: f32[2,1,96], index: 4, kind: input, shape index: {}]
  %s5 = inlined_call_operand.vmem [shape: bf16[2,32,32], index: 5, kind: input, shape index: {}]
  %s6 = inlined_call_operand.vmem [shape: f32[2,1,32], index: 6, kind: input, shape index: {}]
  %s7 = inlined_call_operand.vmem [shape: f32[2,1,32], index: 7, kind: input, shape index: {}]
  %s8 = inlined_call_operand.vmem [shape: f32[2,1,32], index: 8, kind: input, shape index: {}]
  %s9 = inlined_call_operand.vmem [shape: bf16[2,32,128], index: 9, kind: input, shape index: {}]
  %s10 = inlined_call_operand.vmem [shape: f32[2,1,128], index: 10, kind: input, shape index: {}]
  %s11 = inlined_call_operand.vmem [shape: bf16[2,128,32], index: 11, kind: input, shape index: {}]
  %s12 = inlined_call_operand.vmem [shape: f32[2,1,32], index: 12, kind: input, shape index: {}]
  %s13 = inlined_call_operand.hbm [shape: f32[2,8,32], index: 13, kind: output, shape index: {}]
  %s14 = sld [smem:[#allocation0]]
  $region93: #{tpu_custom_call.1} parent=0
    _
  %s16 = ssub.s32 1, %s14
  %s17 = scalar_select 0, %s16, %s14
  $region1: #{tpu_custom_call.1} parent=0
    #allocation3 [shape = 'u8[8192]{0}', space=vmem, size = 0x2000, scoped, tag = 'output window, operand 0']
    #allocation4 [shape = 's32[2]{0}', space=sflag, size = 0x8, scoped, tag = 'scoped memory for tpu_custom_call.1']
    %18 = vsyncpa [#allocation4], 0
    %s19 = scalar_lea.sflag [#allocation4], 1
    %20 = vsyncpa %s19, 0
    loop: start=0, step=1, limit=6
    $region2: #{tpu_custom_call.1} parent=1 // loop_pre_header
      _
    $region3: #{tpu_custom_call.1} parent=1 // loop_header
      %s22 = sphi 0, %s26
      %p23 = scmp.ge.s32.totalorder %s22, 6
      %s29 = sphi 0, %s41
      %s30 = sphi 0, %s37
      %s31 = sphi 0, %s29
      %s32 = sphi 0, %s30
      %s33 = sphi 0, %s31
      %s34 = sphi 0, %s32
      %s44 = sphi 0, %s46
      %s47 = sphi 0, %s44
      %s48 = sphi 0, %s47
      %s64 = sphi 0, %s48
      %s70 = sphi 0, %s72
      %s73 = sphi 0, %s70
      %s74 = sphi 0, %s73
      %s90 = sphi 0, %s74
      %s96 = sphi 0, %s98
      %s99 = sphi 0, %s96
      %s100 = sphi 0, %s99
      %s116 = sphi 0, %s100
      %s122 = sphi 0, %s124
      %s125 = sphi 0, %s122
      %s126 = sphi 0, %s125
      %s142 = sphi 0, %s126
      %s148 = sphi 0, %s150
      %s151 = sphi 0, %s148
      %s152 = sphi 0, %s151
      %s168 = sphi 0, %s152
      %s174 = sphi 0, %s176
      %s177 = sphi 0, %s174
      %s178 = sphi 0, %s177
      %s194 = sphi 0, %s178
      %s200 = sphi 0, %s202
      %s203 = sphi 0, %s200
      %s204 = sphi 0, %s203
      %s220 = sphi 0, %s204
      %s226 = sphi 0, %s228
      %s229 = sphi 0, %s226
      %s230 = sphi 0, %s229
      %s246 = sphi 0, %s230
      %s252 = sphi 0, %s254
      %s255 = sphi 0, %s252
      %s256 = sphi 0, %s255
      %s272 = sphi 0, %s256
      %s278 = sphi 0, %s280
      %s281 = sphi 0, %s278
      %s282 = sphi 0, %s281
      %s298 = sphi 0, %s282
      %s304 = sphi 0, %s306
      %s307 = sphi 0, %s304
      %s308 = sphi 0, %s307
      %s324 = sphi 0, %s308
      %s330 = sphi 0, %s332
      %s333 = sphi 0, %s330
      %s334 = sphi 0, %s333
      %s350 = sphi 0, %s334
      %s356 = sphi 0, %s358
      %s359 = sphi 0, %s356
      %s360 = sphi 0, %s359
      %s376 = sphi 0, %s360
      %s382 = sphi 0, %s384
      %s385 = sphi 0, %s382
      %s386 = sphi 0, %s385
      %s402 = sphi 0, %s386
    $region4: #{tpu_custom_call.1} parent=1 // loop_header_branch
      %25 = sbr.rel (%p23) target = $region8
    $region5: #{tpu_custom_call.1} parent=1 // loop_body
      %s27 = ssub.s32 %s22, 1
      %s28 = ssub.s32 %s22, 2
      %s35 = sadd.s32 1, %s30
      %p36 = scmp.ge.s32.totalorder %s35, 2
      %s37 = scalar_select %p36, 0, %s35
      %s38 = sadd.s32 1, %s29
      %s39 = scalar_select %p36, %s38, %s29
      %p40 = scmp.ge.s32.totalorder %s39, 2
      %s41 = scalar_select %p40, 0, %s39
      %s42 = ssub.s32 %s29, %s41
      %p43 = scmp.eq.s32.totalorder %s42, 0
      %s45 = sadd.s32 %s44, 1
      %s46 = scalar_select %p43, %s44, %s45
      %p49 = pneg %p43
      %p50 = scmp.eq.s32.totalorder %s22, 3
      %p51 = por %p49, %p50
      %p52 = scmp.ne.s32.totalorder %s44, %s47
      %p53 = scmp.eq.s32.totalorder %s22, 0
      %p54 = por %p52, %p53
      %p55 = scmp.ne.s32.totalorder %s44, %s47
      %p56 = scmp.eq.s32.totalorder %s27, 3
      %p57 = por %p55, %p56
      %p58 = scmp.ne.s32.totalorder %s47, %s48
      %p59 = scmp.eq.s32.totalorder %s27, 0
      %p60 = por %p58, %p59
      %p61 = scmp.ne.s32.totalorder %s47, %s48
      %p62 = scmp.eq.s32.totalorder %s28, 3
      %p63 = por %p61, %p62
      %p65 = scmp.ne.s32.totalorder %s48, %s64
      %p66 = scmp.eq.s32.totalorder %s28, 0
      %p67 = por %p65, %p66
      %s68 = ssub.s32 %s30, %s37
      %p69 = scmp.eq.s32.totalorder %s68, 0
      %s71 = sadd.s32 %s70, 1
      %s72 = scalar_select %p69, %s70, %s71
      %p75 = pneg %p69
      %p76 = scmp.eq.s32.totalorder %s22, 3
      %p77 = por %p75, %p76
      %p78 = scmp.ne.s32.totalorder %s70, %s73
      %p79 = scmp.eq.s32.totalorder %s22, 0
      %p80 = por %p78, %p79
      %p81 = scmp.ne.s32.totalorder %s70, %s73
      %p82 = scmp.eq.s32.totalorder %s27, 3
      %p83 = por %p81, %p82
      %p84 = scmp.ne.s32.totalorder %s73, %s74
      %p85 = scmp.eq.s32.totalorder %s27, 0
      %p86 = por %p84, %p85
      %p87 = scmp.ne.s32.totalorder %s73, %s74
      %p88 = scmp.eq.s32.totalorder %s28, 3
      %p89 = por %p87, %p88
      %p91 = scmp.ne.s32.totalorder %s74, %s90
      %p92 = scmp.eq.s32.totalorder %s28, 0
      %p93 = por %p91, %p92
      %s94 = ssub.s32 %s30, %s37
      %p95 = scmp.eq.s32.totalorder %s94, 0
      %s97 = sadd.s32 %s96, 1
      %s98 = scalar_select %p95, %s96, %s97
      %p101 = pneg %p95
      %p102 = scmp.eq.s32.totalorder %s22, 3
      %p103 = por %p101, %p102
      %p104 = scmp.ne.s32.totalorder %s96, %s99
      %p105 = scmp.eq.s32.totalorder %s22, 0
      %p106 = por %p104, %p105
      %p107 = scmp.ne.s32.totalorder %s96, %s99
      %p108 = scmp.eq.s32.totalorder %s27, 3
      %p109 = por %p107, %p108
      %p110 = scmp.ne.s32.totalorder %s99, %s100
      %p111 = scmp.eq.s32.totalorder %s27, 0
      %p112 = por %p110, %p111
      %p113 = scmp.ne.s32.totalorder %s99, %s100
      %p114 = scmp.eq.s32.totalorder %s28, 3
      %p115 = por %p113, %p114
      %p117 = scmp.ne.s32.totalorder %s100, %s116
      %p118 = scmp.eq.s32.totalorder %s28, 0
      %p119 = por %p117, %p118
      %s120 = ssub.s32 %s30, %s37
      %p121 = scmp.eq.s32.totalorder %s120, 0
      %s123 = sadd.s32 %s122, 1
      %s124 = scalar_select %p121, %s122, %s123
      %p127 = pneg %p121
      %p128 = scmp.eq.s32.totalorder %s22, 3
      %p129 = por %p127, %p128
      %p130 = scmp.ne.s32.totalorder %s122, %s125
      %p131 = scmp.eq.s32.totalorder %s22, 0
      %p132 = por %p130, %p131
      %p133 = scmp.ne.s32.totalorder %s122, %s125
      %p134 = scmp.eq.s32.totalorder %s27, 3
      %p135 = por %p133, %p134
      %p136 = scmp.ne.s32.totalorder %s125, %s126
      %p137 = scmp.eq.s32.totalorder %s27, 0
      %p138 = por %p136, %p137
      %p139 = scmp.ne.s32.totalorder %s125, %s126
      %p140 = scmp.eq.s32.totalorder %s28, 3
      %p141 = por %p139, %p140
      %p143 = scmp.ne.s32.totalorder %s126, %s142
      %p144 = scmp.eq.s32.totalorder %s28, 0
      %p145 = por %p143, %p144
      %s146 = ssub.s32 %s30, %s37
      %p147 = scmp.eq.s32.totalorder %s146, 0
      %s149 = sadd.s32 %s148, 1
      %s150 = scalar_select %p147, %s148, %s149
      %p153 = pneg %p147
      %p154 = scmp.eq.s32.totalorder %s22, 3
      %p155 = por %p153, %p154
      %p156 = scmp.ne.s32.totalorder %s148, %s151
      %p157 = scmp.eq.s32.totalorder %s22, 0
      %p158 = por %p156, %p157
      %p159 = scmp.ne.s32.totalorder %s148, %s151
      %p160 = scmp.eq.s32.totalorder %s27, 3
      %p161 = por %p159, %p160
      %p162 = scmp.ne.s32.totalorder %s151, %s152
      %p163 = scmp.eq.s32.totalorder %s27, 0
      %p164 = por %p162, %p163
      %p165 = scmp.ne.s32.totalorder %s151, %s152
      %p166 = scmp.eq.s32.totalorder %s28, 3
      %p167 = por %p165, %p166
      %p169 = scmp.ne.s32.totalorder %s152, %s168
      %p170 = scmp.eq.s32.totalorder %s28, 0
      %p171 = por %p169, %p170
      %s172 = ssub.s32 %s30, %s37
      %p173 = scmp.eq.s32.totalorder %s172, 0
      %s175 = sadd.s32 %s174, 1
      %s176 = scalar_select %p173, %s174, %s175
      %p179 = pneg %p173
      %p180 = scmp.eq.s32.totalorder %s22, 3
      %p181 = por %p179, %p180
      %p182 = scmp.ne.s32.totalorder %s174, %s177
      %p183 = scmp.eq.s32.totalorder %s22, 0
      %p184 = por %p182, %p183
      %p185 = scmp.ne.s32.totalorder %s174, %s177
      %p186 = scmp.eq.s32.totalorder %s27, 3
      %p187 = por %p185, %p186
      %p188 = scmp.ne.s32.totalorder %s177, %s178
      %p189 = scmp.eq.s32.totalorder %s27, 0
      %p190 = por %p188, %p189
      %p191 = scmp.ne.s32.totalorder %s177, %s178
      %p192 = scmp.eq.s32.totalorder %s28, 3
      %p193 = por %p191, %p192
      %p195 = scmp.ne.s32.totalorder %s178, %s194
      %p196 = scmp.eq.s32.totalorder %s28, 0
      %p197 = por %p195, %p196
      %s198 = ssub.s32 %s30, %s37
      %p199 = scmp.eq.s32.totalorder %s198, 0
      %s201 = sadd.s32 %s200, 1
      %s202 = scalar_select %p199, %s200, %s201
      %p205 = pneg %p199
      %p206 = scmp.eq.s32.totalorder %s22, 3
      %p207 = por %p205, %p206
      %p208 = scmp.ne.s32.totalorder %s200, %s203
      %p209 = scmp.eq.s32.totalorder %s22, 0
      %p210 = por %p208, %p209
      %p211 = scmp.ne.s32.totalorder %s200, %s203
      %p212 = scmp.eq.s32.totalorder %s27, 3
      %p213 = por %p211, %p212
      %p214 = scmp.ne.s32.totalorder %s203, %s204
      %p215 = scmp.eq.s32.totalorder %s27, 0
      %p216 = por %p214, %p215
      %p217 = scmp.ne.s32.totalorder %s203, %s204
      %p218 = scmp.eq.s32.totalorder %s28, 3
      %p219 = por %p217, %p218
      %p221 = scmp.ne.s32.totalorder %s204, %s220
      %p222 = scmp.eq.s32.totalorder %s28, 0
      %p223 = por %p221, %p222
      %s224 = ssub.s32 %s30, %s37
      %p225 = scmp.eq.s32.totalorder %s224, 0
      %s227 = sadd.s32 %s226, 1
      %s228 = scalar_select %p225, %s226, %s227
      %p231 = pneg %p225
      %p232 = scmp.eq.s32.totalorder %s22, 3
      %p233 = por %p231, %p232
      %p234 = scmp.ne.s32.totalorder %s226, %s229
      %p235 = scmp.eq.s32.totalorder %s22, 0
      %p236 = por %p234, %p235
      %p237 = scmp.ne.s32.totalorder %s226, %s229
      %p238 = scmp.eq.s32.totalorder %s27, 3
      %p239 = por %p237, %p238
      %p240 = scmp.ne.s32.totalorder %s229, %s230
      %p241 = scmp.eq.s32.totalorder %s27, 0
      %p242 = por %p240, %p241
      %p243 = scmp.ne.s32.totalorder %s229, %s230
      %p244 = scmp.eq.s32.totalorder %s28, 3
      %p245 = por %p243, %p244
      %p247 = scmp.ne.s32.totalorder %s230, %s246
      %p248 = scmp.eq.s32.totalorder %s28, 0
      %p249 = por %p247, %p248
      %s250 = ssub.s32 %s30, %s37
      %p251 = scmp.eq.s32.totalorder %s250, 0
      %s253 = sadd.s32 %s252, 1
      %s254 = scalar_select %p251, %s252, %s253
      %p257 = pneg %p251
      %p258 = scmp.eq.s32.totalorder %s22, 3
      %p259 = por %p257, %p258
      %p260 = scmp.ne.s32.totalorder %s252, %s255
      %p261 = scmp.eq.s32.totalorder %s22, 0
      %p262 = por %p260, %p261
      %p263 = scmp.ne.s32.totalorder %s252, %s255
      %p264 = scmp.eq.s32.totalorder %s27, 3
      %p265 = por %p263, %p264
      %p266 = scmp.ne.s32.totalorder %s255, %s256
      %p267 = scmp.eq.s32.totalorder %s27, 0
      %p268 = por %p266, %p267
      %p269 = scmp.ne.s32.totalorder %s255, %s256
      %p270 = scmp.eq.s32.totalorder %s28, 3
      %p271 = por %p269, %p270
      %p273 = scmp.ne.s32.totalorder %s256, %s272
      %p274 = scmp.eq.s32.totalorder %s28, 0
      %p275 = por %p273, %p274
      %s276 = ssub.s32 %s30, %s37
      %p277 = scmp.eq.s32.totalorder %s276, 0
      %s279 = sadd.s32 %s278, 1
      %s280 = scalar_select %p277, %s278, %s279
      %p283 = pneg %p277
      %p284 = scmp.eq.s32.totalorder %s22, 3
      %p285 = por %p283, %p284
      %p286 = scmp.ne.s32.totalorder %s278, %s281
      %p287 = scmp.eq.s32.totalorder %s22, 0
      %p288 = por %p286, %p287
      %p289 = scmp.ne.s32.totalorder %s278, %s281
      %p290 = scmp.eq.s32.totalorder %s27, 3
      %p291 = por %p289, %p290
      %p292 = scmp.ne.s32.totalorder %s281, %s282
      %p293 = scmp.eq.s32.totalorder %s27, 0
      %p294 = por %p292, %p293
      %p295 = scmp.ne.s32.totalorder %s281, %s282
      %p296 = scmp.eq.s32.totalorder %s28, 3
      %p297 = por %p295, %p296
      %p299 = scmp.ne.s32.totalorder %s282, %s298
      %p300 = scmp.eq.s32.totalorder %s28, 0
      %p301 = por %p299, %p300
      %s302 = ssub.s32 %s30, %s37
      %p303 = scmp.eq.s32.totalorder %s302, 0
      %s305 = sadd.s32 %s304, 1
      %s306 = scalar_select %p303, %s304, %s305
      %p309 = pneg %p303
      %p310 = scmp.eq.s32.totalorder %s22, 3
      %p311 = por %p309, %p310
      %p312 = scmp.ne.s32.totalorder %s304, %s307
      %p313 = scmp.eq.s32.totalorder %s22, 0
      %p314 = por %p312, %p313
      %p315 = scmp.ne.s32.totalorder %s304, %s307
      %p316 = scmp.eq.s32.totalorder %s27, 3
      %p317 = por %p315, %p316
      %p318 = scmp.ne.s32.totalorder %s307, %s308
      %p319 = scmp.eq.s32.totalorder %s27, 0
      %p320 = por %p318, %p319
      %p321 = scmp.ne.s32.totalorder %s307, %s308
      %p322 = scmp.eq.s32.totalorder %s28, 3
      %p323 = por %p321, %p322
      %p325 = scmp.ne.s32.totalorder %s308, %s324
      %p326 = scmp.eq.s32.totalorder %s28, 0
      %p327 = por %p325, %p326
      %s328 = ssub.s32 %s30, %s37
      %p329 = scmp.eq.s32.totalorder %s328, 0
      %s331 = sadd.s32 %s330, 1
      %s332 = scalar_select %p329, %s330, %s331
      %p335 = pneg %p329
      %p336 = scmp.eq.s32.totalorder %s22, 3
      %p337 = por %p335, %p336
      %p338 = scmp.ne.s32.totalorder %s330, %s333
      %p339 = scmp.eq.s32.totalorder %s22, 0
      %p340 = por %p338, %p339
      %p341 = scmp.ne.s32.totalorder %s330, %s333
      %p342 = scmp.eq.s32.totalorder %s27, 3
      %p343 = por %p341, %p342
      %p344 = scmp.ne.s32.totalorder %s333, %s334
      %p345 = scmp.eq.s32.totalorder %s27, 0
      %p346 = por %p344, %p345
      %p347 = scmp.ne.s32.totalorder %s333, %s334
      %p348 = scmp.eq.s32.totalorder %s28, 3
      %p349 = por %p347, %p348
      %p351 = scmp.ne.s32.totalorder %s334, %s350
      %p352 = scmp.eq.s32.totalorder %s28, 0
      %p353 = por %p351, %p352
      %s354 = ssub.s32 %s30, %s37
      %p355 = scmp.eq.s32.totalorder %s354, 0
      %s357 = sadd.s32 %s356, 1
      %s358 = scalar_select %p355, %s356, %s357
      %p361 = pneg %p355
      %p362 = scmp.eq.s32.totalorder %s22, 3
      %p363 = por %p361, %p362
      %p364 = scmp.ne.s32.totalorder %s356, %s359
      %p365 = scmp.eq.s32.totalorder %s22, 0
      %p366 = por %p364, %p365
      %p367 = scmp.ne.s32.totalorder %s356, %s359
      %p368 = scmp.eq.s32.totalorder %s27, 3
      %p369 = por %p367, %p368
      %p370 = scmp.ne.s32.totalorder %s359, %s360
      %p371 = scmp.eq.s32.totalorder %s27, 0
      %p372 = por %p370, %p371
      %p373 = scmp.ne.s32.totalorder %s359, %s360
      %p374 = scmp.eq.s32.totalorder %s28, 3
      %p375 = por %p373, %p374
      %p377 = scmp.ne.s32.totalorder %s360, %s376
      %p378 = scmp.eq.s32.totalorder %s28, 0
      %p379 = por %p377, %p378
      %s380 = ssub.s32 %s29, %s41
      %p381 = scmp.eq.s32.totalorder %s380, 0
      %s383 = sadd.s32 %s382, 1
      %s384 = scalar_select %p381, %s382, %s383
      %p387 = pneg %p381
      %p388 = scmp.eq.s32.totalorder %s22, 3
      %p389 = por %p387, %p388
      %p390 = scmp.ne.s32.totalorder %s382, %s385
      %p391 = scmp.eq.s32.totalorder %s22, 0
      %p392 = por %p390, %p391
      %p393 = scmp.ne.s32.totalorder %s382, %s385
      %p394 = scmp.eq.s32.totalorder %s27, 3
      %p395 = por %p393, %p394
      %p396 = scmp.ne.s32.totalorder %s385, %s386
      %p397 = scmp.eq.s32.totalorder %s27, 0
      %p398 = por %p396, %p397
      %p399 = scmp.ne.s32.totalorder %s385, %s386
      %p400 = scmp.eq.s32.totalorder %s28, 3
      %p401 = por %p399, %p400
      %p403 = scmp.ne.s32.totalorder %s386, %s402
      %p404 = scmp.eq.s32.totalorder %s28, 0
      %p405 = por %p403, %p404
      %p406 = scmp.le.s32.totalorder 1, %s22
      %p407 = scmp.lt.s32.totalorder %s22, 5
      %p408 = pnand %p406, %p407
      %p409 = pneg %p408
      // Predicated region
      $region9: #{tpu_custom_call.1} parent=5 // pred_check
        _
      $region10: #{tpu_custom_call.1} parent=5 // pred_check_branch
        %411 = sbr.rel (%p408) target = $region12
      $region11: #{tpu_custom_call.1} parent=5 // pred_region
        %s412 = ssub.s32 %s22, 1
      $region12: #{tpu_custom_call.1} parent=5 // pred_fallthru
        _
      %p413 = scmp.lt.s32.totalorder %s22, 4
      // Predicated region
      $region13: #{tpu_custom_call.1} parent=5 // pred_check
        %p414 = pneg %p413
      $region14: #{tpu_custom_call.1} parent=5 // pred_check_branch
        %416 = sbr.rel (%p414) target = $region16
      $region15: #{tpu_custom_call.1} parent=5 // pred_region
        // Predicated region
        $region17: #{tpu_custom_call.1} parent=15 // pred_check
          %p417 = pneg %p54
        $region18: #{tpu_custom_call.1} parent=15 // pred_check_branch
          %419 = sbr.rel (%p417) target = $region20
        $region19: #{tpu_custom_call.1} parent=15 // pred_region
          %p420 = scmp.lt.s32.totalorder %s29, 1
          %s421 = scalar_select %p420, %s29, 1
          %s422 = smul.addr %s421, 8
          %s423 = scalar_lea.vmem %s0, %s422
        $region20: #{tpu_custom_call.1} parent=15 // pred_fallthru
          _
        // Predicated region
        $region21: #{tpu_custom_call.1} parent=15 // pred_check
          %p424 = pneg %p80
        $region22: #{tpu_custom_call.1} parent=15 // pred_check_branch
          %426 = sbr.rel (%p424) target = $region24
        $region23: #{tpu_custom_call.1} parent=15 // pred_region
          %p427 = scmp.lt.s32.totalorder %s30, 1
          %s428 = scalar_select %p427, %s30, 1
          %s429 = scalar_lea.vmem %s1, %s428
        $region24: #{tpu_custom_call.1} parent=15 // pred_fallthru
          _
        // Predicated region
        $region25: #{tpu_custom_call.1} parent=15 // pred_check
          %p430 = pneg %p106
        $region26: #{tpu_custom_call.1} parent=15 // pred_check_branch
          %432 = sbr.rel (%p430) target = $region28
        $region27: #{tpu_custom_call.1} parent=15 // pred_region
          %p433 = scmp.lt.s32.totalorder %s30, 1
          %s434 = scalar_select %p433, %s30, 1
          %s435 = scalar_lea.vmem %s2, %s434
        $region28: #{tpu_custom_call.1} parent=15 // pred_fallthru
          _
        // Predicated region
        $region29: #{tpu_custom_call.1} parent=15 // pred_check
          %p436 = pneg %p132
        $region30: #{tpu_custom_call.1} parent=15 // pred_check_branch
          %438 = sbr.rel (%p436) target = $region32
        $region31: #{tpu_custom_call.1} parent=15 // pred_region
          %p439 = scmp.lt.s32.totalorder %s30, 1
          %s440 = scalar_select %p439, %s30, 1
          %s441 = smul.addr %s440, 4
          %s442 = smul.addr %s441, 4
          %s443 = scalar_lea.vmem %s3, %s442
        $region32: #{tpu_custom_call.1} parent=15 // pred_fallthru
          _
        // Predicated region
        $region33: #{tpu_custom_call.1} parent=15 // pred_check
          %p444 = pneg %p158
        $region34: #{tpu_custom_call.1} parent=15 // pred_check_branch
          %446 = sbr.rel (%p444) target = $region36
        $region35: #{tpu_custom_call.1} parent=15 // pred_region
          %p447 = scmp.lt.s32.totalorder %s30, 1
          %s448 = scalar_select %p447, %s30, 1
          %s449 = scalar_lea.vmem %s4, %s448
        $region36: #{tpu_custom_call.1} parent=15 // pred_fallthru
          _
        // Predicated region
        $region37: #{tpu_custom_call.1} parent=15 // pred_check
          %p450 = pneg %p184
        $region38: #{tpu_custom_call.1} parent=15 // pred_check_branch
          %452 = sbr.rel (%p450) target = $region40
        $region39: #{tpu_custom_call.1} parent=15 // pred_region
          %p453 = scmp.lt.s32.totalorder %s30, 1
          %s454 = scalar_select %p453, %s30, 1
          %s455 = smul.addr %s454, 4
          %s456 = smul.addr %s455, 4
          %s457 = scalar_lea.vmem %s5, %s456
        $region40: #{tpu_custom_call.1} parent=15 // pred_fallthru
          _
        // Predicated region
        $region41: #{tpu_custom_call.1} parent=15 // pred_check
          %p458 = pneg %p210
        $region42: #{tpu_custom_call.1} parent=15 // pred_check_branch
          %460 = sbr.rel (%p458) target = $region44
        $region43: #{tpu_custom_call.1} parent=15 // pred_region
          %p461 = scmp.lt.s32.totalorder %s30, 1
          %s462 = scalar_select %p461, %s30, 1
          %s463 = scalar_lea.vmem %s6, %s462
        $region44: #{tpu_custom_call.1} parent=15 // pred_fallthru
          _
        // Predicated region
        $region45: #{tpu_custom_call.1} parent=15 // pred_check
          %p464 = pneg %p236
        $region46: #{tpu_custom_call.1} parent=15 // pred_check_branch
          %466 = sbr.rel (%p464) target = $region48
        $region47: #{tpu_custom_call.1} parent=15 // pred_region
          %p467 = scmp.lt.s32.totalorder %s30, 1
          %s468 = scalar_select %p467, %s30, 1
          %s469 = scalar_lea.vmem %s7, %s468
        $region48: #{tpu_custom_call.1} parent=15 // pred_fallthru
          _
        // Predicated region
        $region49: #{tpu_custom_call.1} parent=15 // pred_check
          %p470 = pneg %p262
        $region50: #{tpu_custom_call.1} parent=15 // pred_check_branch
          %472 = sbr.rel (%p470) target = $region52
        $region51: #{tpu_custom_call.1} parent=15 // pred_region
          %p473 = scmp.lt.s32.totalorder %s30, 1
          %s474 = scalar_select %p473, %s30, 1
          %s475 = scalar_lea.vmem %s8, %s474
        $region52: #{tpu_custom_call.1} parent=15 // pred_fallthru
          _
        // Predicated region
        $region53: #{tpu_custom_call.1} parent=15 // pred_check
          %p476 = pneg %p288
        $region54: #{tpu_custom_call.1} parent=15 // pred_check_branch
          %478 = sbr.rel (%p476) target = $region56
        $region55: #{tpu_custom_call.1} parent=15 // pred_region
          %p479 = scmp.lt.s32.totalorder %s30, 1
          %s480 = scalar_select %p479, %s30, 1
          %s481 = smul.addr %s480, 4
          %s482 = smul.addr %s481, 4
          %s483 = scalar_lea.vmem %s9, %s482
        $region56: #{tpu_custom_call.1} parent=15 // pred_fallthru
          _
        // Predicated region
        $region57: #{tpu_custom_call.1} parent=15 // pred_check
          %p484 = pneg %p314
        $region58: #{tpu_custom_call.1} parent=15 // pred_check_branch
          %486 = sbr.rel (%p484) target = $region60
        $region59: #{tpu_custom_call.1} parent=15 // pred_region
          %p487 = scmp.lt.s32.totalorder %s30, 1
          %s488 = scalar_select %p487, %s30, 1
          %s489 = scalar_lea.vmem %s10, %s488
        $region60: #{tpu_custom_call.1} parent=15 // pred_fallthru
          _
        // Predicated region
        $region61: #{tpu_custom_call.1} parent=15 // pred_check
          %p490 = pneg %p340
        $region62: #{tpu_custom_call.1} parent=15 // pred_check_branch
          %492 = sbr.rel (%p490) target = $region64
        $region63: #{tpu_custom_call.1} parent=15 // pred_region
          %p493 = scmp.lt.s32.totalorder %s30, 1
          %s494 = scalar_select %p493, %s30, 1
          %s495 = smul.addr %s494, 16
          %s496 = smul.addr %s495, 4
          %s497 = scalar_lea.vmem %s11, %s496
        $region64: #{tpu_custom_call.1} parent=15 // pred_fallthru
          _
        // Predicated region
        $region65: #{tpu_custom_call.1} parent=15 // pred_check
          %p498 = pneg %p366
        $region66: #{tpu_custom_call.1} parent=15 // pred_check_branch
          %500 = sbr.rel (%p498) target = $region68
        $region67: #{tpu_custom_call.1} parent=15 // pred_region
          %p501 = scmp.lt.s32.totalorder %s30, 1
          %s502 = scalar_select %p501, %s30, 1
          %s503 = scalar_lea.vmem %s12, %s502
        $region68: #{tpu_custom_call.1} parent=15 // pred_fallthru
          _
      $region16: #{tpu_custom_call.1} parent=5 // pred_fallthru
        _
      %p504 = scmp.le.s32.totalorder 1, %s22
      %p505 = scmp.lt.s32.totalorder %s22, 5
      %p506 = pnand %p504, %p505
      %p507 = pneg %p506
      // Predicated region
      $region69: #{tpu_custom_call.1} parent=5 // pred_check
        _
      $region70: #{tpu_custom_call.1} parent=5 // pred_check_branch
        %509 = sbr.rel (%p506) target = $region72
      $region71: #{tpu_custom_call.1} parent=5 // pred_region
        %s510 = ssub.s32 %s22, 1
        %p511 = scmp.lt.s32.totalorder %s31, 1
        %s512 = scalar_select %p511, %s31, 1
        %s513 = smul.addr %s512, 8
        %s514 = scalar_lea.vmem %s0, %s513
        %p515 = pneg %p60
        %p516 = pneg %p57
        %p517 = scmp.lt.s32.totalorder %s32, 1
        %s518 = scalar_select %p517, %s32, 1
        %s519 = scalar_lea.vmem %s1, %s518
        %p520 = pneg %p86
        %p521 = pneg %p83
        %p522 = scmp.lt.s32.totalorder %s32, 1
        %s523 = scalar_select %p522, %s32, 1
        %s524 = scalar_lea.vmem %s2, %s523
        %p525 = pneg %p112
        %p526 = pneg %p109
        %p527 = scmp.lt.s32.totalorder %s32, 1
        %s528 = scalar_select %p527, %s32, 1
        %s529 = smul.addr %s528, 4
        %s530 = smul.addr %s529, 4
        %s531 = scalar_lea.vmem %s3, %s530
        %p532 = pneg %p138
        %p533 = pneg %p135
        %p534 = scmp.lt.s32.totalorder %s32, 1
        %s535 = scalar_select %p534, %s32, 1
        %s536 = scalar_lea.vmem %s4, %s535
        %p537 = pneg %p164
        %p538 = pneg %p161
        %p539 = scmp.lt.s32.totalorder %s32, 1
        %s540 = scalar_select %p539, %s32, 1
        %s541 = smul.addr %s540, 4
        %s542 = smul.addr %s541, 4
        %s543 = scalar_lea.vmem %s5, %s542
        %p544 = pneg %p190
        %p545 = pneg %p187
        %p546 = scmp.lt.s32.totalorder %s32, 1
        %s547 = scalar_select %p546, %s32, 1
        %s548 = scalar_lea.vmem %s6, %s547
        %p549 = pneg %p216
        %p550 = pneg %p213
        %p551 = scmp.lt.s32.totalorder %s32, 1
        %s552 = scalar_select %p551, %s32, 1
        %s553 = scalar_lea.vmem %s7, %s552
        %p554 = pneg %p242
        %p555 = pneg %p239
        %p556 = scmp.lt.s32.totalorder %s32, 1
        %s557 = scalar_select %p556, %s32, 1
        %s558 = scalar_lea.vmem %s8, %s557
        %p559 = pneg %p268
        %p560 = pneg %p265
        %p561 = scmp.lt.s32.totalorder %s32, 1
        %s562 = scalar_select %p561, %s32, 1
        %s563 = smul.addr %s562, 4
        %s564 = smul.addr %s563, 4
        %s565 = scalar_lea.vmem %s9, %s564
        %p566 = pneg %p294
        %p567 = pneg %p291
        %p568 = scmp.lt.s32.totalorder %s32, 1
        %s569 = scalar_select %p568, %s32, 1
        %s570 = scalar_lea.vmem %s10, %s569
        %p571 = pneg %p320
        %p572 = pneg %p317
        %p573 = scmp.lt.s32.totalorder %s32, 1
        %s574 = scalar_select %p573, %s32, 1
        %s575 = smul.addr %s574, 16
        %s576 = smul.addr %s575, 4
        %s577 = scalar_lea.vmem %s11, %s576
        %p578 = pneg %p346
        %p579 = pneg %p343
        %p580 = scmp.lt.s32.totalorder %s32, 1
        %s581 = scalar_select %p580, %s32, 1
        %s582 = scalar_lea.vmem %s12, %s581
        %p583 = pneg %p372
        %p584 = pneg %p369
        %p585 = pneg %p398
        %p586 = pneg %p395
        %s587 = sand.u32 %s385, 1
        %s588 = scalar_lea.sflag [#allocation4], %s587
        %s589 = sand.u32 %s385, 1
        %s590 = smul.addr %s589, 8
        %s591 = scalar_lea.vmem [#allocation3], %s590
        %p592 = scmp.lt.s32.totalorder %s31, 1
        %s593 = scalar_select %p592, %s31, 1
        %s594 = smul.addr %s593, 8
        %s595 = scalar_lea.vmem %s0, %s594
        %p596 = scmp.lt.s32.totalorder %s32, 1
        %s597 = scalar_select %p596, %s32, 1
        %s598 = scalar_lea.vmem %s1, %s597
        %p599 = scmp.lt.s32.totalorder %s32, 1
        %s600 = scalar_select %p599, %s32, 1
        %s601 = scalar_lea.vmem %s2, %s600
        %p602 = scmp.lt.s32.totalorder %s32, 1
        %s603 = scalar_select %p602, %s32, 1
        %s604 = smul.addr %s603, 4
        %s605 = smul.addr %s604, 4
        %s606 = scalar_lea.vmem %s3, %s605
        %p607 = scmp.lt.s32.totalorder %s32, 1
        %s608 = scalar_select %p607, %s32, 1
        %s609 = scalar_lea.vmem %s4, %s608
        %p610 = scmp.lt.s32.totalorder %s32, 1
        %s611 = scalar_select %p610, %s32, 1
        %s612 = smul.addr %s611, 4
        %s613 = smul.addr %s612, 4
        %s614 = scalar_lea.vmem %s5, %s613
        %p615 = scmp.lt.s32.totalorder %s32, 1
        %s616 = scalar_select %p615, %s32, 1
        %s617 = scalar_lea.vmem %s6, %s616
        %p618 = scmp.lt.s32.totalorder %s32, 1
        %s619 = scalar_select %p618, %s32, 1
        %s620 = scalar_lea.vmem %s7, %s619
        %p621 = scmp.lt.s32.totalorder %s32, 1
        %s622 = scalar_select %p621, %s32, 1
        %s623 = scalar_lea.vmem %s8, %s622
        %p624 = scmp.lt.s32.totalorder %s32, 1
        %s625 = scalar_select %p624, %s32, 1
        %s626 = smul.addr %s625, 4
        %s627 = smul.addr %s626, 4
        %s628 = scalar_lea.vmem %s9, %s627
        %p629 = scmp.lt.s32.totalorder %s32, 1
        %s630 = scalar_select %p629, %s32, 1
        %s631 = scalar_lea.vmem %s10, %s630
        %p632 = scmp.lt.s32.totalorder %s32, 1
        %s633 = scalar_select %p632, %s32, 1
        %s634 = smul.addr %s633, 16
        %s635 = smul.addr %s634, 4
        %s636 = scalar_lea.vmem %s11, %s635
        %p637 = scmp.lt.s32.totalorder %s32, 1
        %s638 = scalar_select %p637, %s32, 1
        %s639 = scalar_lea.vmem %s12, %s638
        %p641 = scmp.eq.s32.totalorder %s32, 0
        // Predicated region
        $region73: #{tpu_custom_call.1} parent=71 // pred_check
          %p642 = pneg %p641
        $region74: #{tpu_custom_call.1} parent=71 // pred_check_branch
          %644 = sbr.rel (%p642) target = $region76
        $region75: #{tpu_custom_call.1} parent=71 // pred_region
          %v645 = vld [vmem:[%s595] sm:$0xff]
          %vm646 = vcmask 261120
          %647 = vst.msk [vmem:[#allocation2] sm:$0xff] %vm646, %v645
        $region76: #{tpu_custom_call.1} parent=71 // pred_fallthru
          _
        %v648 = vld [vmem:[#allocation2] sm:$0xff]
        %v649 = vld [vmem:[%s598] sm:$0x1]
        %v650 = vld [vmem:[%s601] sm:$0x1]
        %vm651 = vcmask 261120
        %v652 = vsel %vm651, %v648, 0.0
        %653 = vadd.xlane.f32.xlu0 %v652
        %v654 = vpop.xlane.xlu0 %653
        %v655 = vrcp.pop 32.0
        %v656 = vmul.f32 %v654, %v655
        %v657 = vsub.f32 %v648, %v656
        %v658 = vmul.f32 %v657, %v657
        %v659 = vsel %vm651, %v658, 0.0
        %660 = vadd.xlane.f32.xlu0 %v659
        %v661 = vpop.xlane.xlu0 %660
        %v662 = vmul.f32 %v661, %v655
        %v663 = vadd.f32 %v662, 1e-05
        %v664 = vrsqrt.pop %v663
        %v665 = vmul.f32 %v657, %v664
        %v667 = vlaneseq
        %v668 = vshrl.u32 %v667, 7
        %v669 = vsub.s32 0, %v668
        %v670 = vrot.slane %v649, %v669
        %v672 = vmul.f32 %v665, %v670
        %v674 = vlaneseq
        %v675 = vshrl.u32 %v674, 7
        %v676 = vsub.s32 0, %v675
        %v677 = vrot.slane %v650, %v676
        %v679 = vadd.f32 %v672, %v677
        %v680 = vpack.c.bf16 %v679, %v679
        %v681 = vld [vmem:[%s606] sm:$0xf]
        %v682 = vld [vmem:[%s606 + $0x4] sm:$0xf]
        %v683 = vld [vmem:[%s606 + $0x8] sm:$0xf]
        %v684 = vld [vmem:[%s606 + $0xc] sm:$0xf]
        %v685 = vld [vmem:[%s609] sm:$0x1]
        %v687 = vlaneseq
        %v688 = vshrl.u32 %v687, 7
        %v689 = vsub.s32 0, %v688
        %v690 = vrot.slane %v685, %v689
        %v696 = vunpack.c.l.b16 %v681
        %v697 = vunpack.c.l.b16 %v682
        %v698 = vunpack.c.l.b16 %v683
        %v699 = vunpack.c.l.b16 %v684
        %v700 = vpack.c.b16 %v697, %v696
        %v701 = vpack.c.b16 %v699, %v698
        %v705 = vsel %vm651, %v680, 0
        %707 = vmatprep.subr.bf16.mxu0 0
        %708 = vmatpush1.bf16.msra.mxu0 0
        %709 = vmatprep.subr.bf16.mxu0 0
        %710 = vmatpush1.bf16.msra.mxu0 0
        %711 = vmatprep.subr.bf16.mxu0 0
        %712 = vmatpush1.bf16.msra.mxu0 0
        %713 = vmatprep.subr.bf16.mxu0 0
        %714 = vmatpush1.bf16.msra.mxu0 0
        %715 = vmatprep.subr.bf16.mxu0 0
        %716 = vmatpush1.bf16.msra.mxu0 0
        %717 = vmatprep.subr.bf16.mxu0 0
        %718 = vmatpush1.bf16.msra.mxu0 0
        %719 = vmatprep.subr.bf16.mxu0 0
        %720 = vmatpush1.bf16.msra.mxu0 %v701
        %721 = vmatprep.subr.bf16.mxu0 0
        %722 = vmatpush1.bf16.msra.mxu0 %v700
        %723 = vmatprep.subr.bf16.mxu0 0
        %724 = vmatpush2.bf16.msra.mxu0 0
        %725 = vmatprep.subr.bf16.mxu0 0
        %726 = vmatpush2.bf16.msra.mxu0 0
        %727 = vmatprep.subr.bf16.mxu0 0
        %728 = vmatpush2.bf16.msra.mxu0 0
        %729 = vmatprep.subr.bf16.mxu0 0
        %730 = vmatpush2.bf16.msra.mxu0 0
        %731 = vmatprep.subr.bf16.mxu0 0
        %732 = vmatpush2.bf16.msra.mxu0 0
        %733 = vmatprep.subr.bf16.mxu0 0
        %734 = vmatpush2.bf16.msra.mxu0 0
        %735 = vmatprep.subr.bf16.mxu0 0
        %736 = vmatpush2.bf16.msra.mxu0 0
        %737 = vmatprep.subr.bf16.mxu0 0
        %738 = vmatpush2.bf16.msra.mxu0 0
        %739 = vmatprep.mubr.bf16.mxu0 0
        %740 = vmatmul.mubr.bf16.gmra.mxu0 %v705
        %v741 = vpop.f32.mrf.mxu0
        %v742 = vadd.f32 %v690, %v741
        %v743 = vpop.f32.mrf.mxu0
        %v744 = vpop.f32.mrf.mxu0
        %v745 = vpop.f32.mrf.mxu0
        %746 = vdwg.mxu0
        %748 = vrot.lane.b32.xlu0 %v742, 112
        %v749 = vpop.permute.xlu0 %748
        %v751 = vcombine.high %v742, 0.0
        %v753 = vunpack.c.l.s4 1983009808
        %v754 = vunpack.c.0.s8 %v753
        %v755 = vlaneseq
        %v756 = vshrl.u32 %v755, 7
        %v757 = vsub.s32 %v754, %v756
        %v758 = vrot.slane %v742, %v757
        %v760 = vunpack.c.l.s4 1983009808
        %v761 = vunpack.c.0.s8 %v760
        %v762 = vlaneseq
        %v763 = vshrl.u32 %v762, 7
        %v764 = vsub.s32 %v761, %v763
        %v765 = vrot.slane %v751, %v764
        %v766 = vcombine.high %v749, 0.0
        %v768 = vunpack.c.l.s4 1983009808
        %v769 = vunpack.c.0.s8 %v768
        %v770 = vlaneseq
        %v771 = vshrl.u32 %v770, 7
        %v772 = vsub.s32 %v769, %v771
        %v773 = vrot.slane %v749, %v772
        %v775 = vunpack.c.l.s4 1983009808
        %v776 = vunpack.c.0.s8 %v775
        %v777 = vlaneseq
        %v778 = vshrl.u32 %v777, 7
        %v779 = vsub.s32 %v776, %v778
        %v780 = vrot.slane %v766, %v779
        %v781 = vcombine.low %v758, %v773
        %v782 = vcombine.high %v758, %v773
        %v784 = vunpack.c.l.s4 1934713408
        %v785 = vunpack.c.0.s8 %v784
        %v786 = vlaneseq
        %v787 = vshrl.u32 %v786, 7
        %v788 = vsub.s32 %v785, %v787
        %v789 = vrot.slane %v781, %v788
        %v791 = vunpack.c.l.s4 1934713408
        %v792 = vunpack.c.0.s8 %v791
        %v793 = vlaneseq
        %v794 = vshrl.u32 %v793, 7
        %v795 = vsub.s32 %v792, %v794
        %v796 = vrot.slane %v782, %v795
        %v797 = vcombine.low %v765, %v780
        %v798 = vcombine.high %v765, %v780
        %v800 = vunpack.c.l.s4 1934713408
        %v801 = vunpack.c.0.s8 %v800
        %v802 = vlaneseq
        %v803 = vshrl.u32 %v802, 7
        %v804 = vsub.s32 %v801, %v803
        %v805 = vrot.slane %v797, %v804
        %v807 = vunpack.c.l.s4 1934713408
        %v808 = vunpack.c.0.s8 %v807
        %v809 = vlaneseq
        %v810 = vshrl.u32 %v809, 7
        %v811 = vsub.s32 %v808, %v810
        %v812 = vrot.slane %v798, %v811
        %v813 = vcombine.high %v789, 0.0
        %v814 = vcombine.high %v796, 0.0
        %v815 = vcombine.high %v805, 0.0
        %v816 = vcombine.high %v812, 0.0
        %v817 = vcombine.low %v789, %v796
        %v819 = vunpack.c.l.s4 1983009808
        %v820 = vunpack.c.0.s8 %v819
        %v821 = vlaneseq
        %v822 = vshrl.u32 %v821, 7
        %v823 = vsub.s32 %v820, %v822
        %v824 = vrot.slane %v817, %v823
        %v825 = vcombine.low %v813, %v814
        %v827 = vunpack.c.l.s4 1983009808
        %v828 = vunpack.c.0.s8 %v827
        %v829 = vlaneseq
        %v830 = vshrl.u32 %v829, 7
        %v831 = vsub.s32 %v828, %v830
        %v832 = vrot.slane %v825, %v831
        %v833 = vcombine.low %v805, %v812
        %v835 = vunpack.c.l.s4 1983009808
        %v836 = vunpack.c.0.s8 %v835
        %v837 = vlaneseq
        %v838 = vshrl.u32 %v837, 7
        %v839 = vsub.s32 %v836, %v838
        %v840 = vrot.slane %v833, %v839
        %v841 = vcombine.low %v815, %v816
        %v843 = vunpack.c.l.s4 1983009808
        %v844 = vunpack.c.0.s8 %v843
        %v845 = vlaneseq
        %v846 = vshrl.u32 %v845, 7
        %v847 = vsub.s32 %v844, %v846
        %v848 = vrot.slane %v841, %v847
        %v849 = vcombine.low %v824, %v832
        %v851 = vunpack.c.l.s4 1934713408
        %v852 = vunpack.c.0.s8 %v851
        %v853 = vlaneseq
        %v854 = vshrl.u32 %v853, 7
        %v855 = vsub.s32 %v852, %v854
        %v856 = vrot.slane %v849, %v855
        %v857 = vcombine.low %v840, %v848
        %v859 = vunpack.c.l.s4 1934713408
        %v860 = vunpack.c.0.s8 %v859
        %v861 = vlaneseq
        %v862 = vshrl.u32 %v861, 7
        %v863 = vsub.s32 %v860, %v862
        %v864 = vrot.slane %v857, %v863
        %v865 = vcombine.low %v856, %v864
        %v866 = vcombine.high %v856, %v864
        %v867 = vpack.c.bf16 %v865, %v865
        %v868 = vpack.c.bf16 %v866, %v866
        %869 = vrot.lane.b32.xlu0 %v742, 96
        %v870 = vpop.permute.xlu0 %869
        %871 = vrot.lane.b32.xlu0 %v749, 96
        %v872 = vpop.permute.xlu0 %871
        %v875 = vcombine.high %v870, 0.0
        %v877 = vunpack.c.l.s4 1983009808
        %v878 = vunpack.c.0.s8 %v877
        %v879 = vlaneseq
        %v880 = vshrl.u32 %v879, 7
        %v881 = vsub.s32 %v878, %v880
        %v882 = vrot.slane %v870, %v881
        %v884 = vunpack.c.l.s4 1983009808
        %v885 = vunpack.c.0.s8 %v884
        %v886 = vlaneseq
        %v887 = vshrl.u32 %v886, 7
        %v888 = vsub.s32 %v885, %v887
        %v889 = vrot.slane %v875, %v888
        %v890 = vcombine.high %v872, 0.0
        %v892 = vunpack.c.l.s4 1983009808
        %v893 = vunpack.c.0.s8 %v892
        %v894 = vlaneseq
        %v895 = vshrl.u32 %v894, 7
        %v896 = vsub.s32 %v893, %v895
        %v897 = vrot.slane %v872, %v896
        %v899 = vunpack.c.l.s4 1983009808
        %v900 = vunpack.c.0.s8 %v899
        %v901 = vlaneseq
        %v902 = vshrl.u32 %v901, 7
        %v903 = vsub.s32 %v900, %v902
        %v904 = vrot.slane %v890, %v903
        %v905 = vcombine.low %v882, %v897
        %v906 = vcombine.high %v882, %v897
        %v908 = vunpack.c.l.s4 1934713408
        %v909 = vunpack.c.0.s8 %v908
        %v910 = vlaneseq
        %v911 = vshrl.u32 %v910, 7
        %v912 = vsub.s32 %v909, %v911
        %v913 = vrot.slane %v905, %v912
        %v915 = vunpack.c.l.s4 1934713408
        %v916 = vunpack.c.0.s8 %v915
        %v917 = vlaneseq
        %v918 = vshrl.u32 %v917, 7
        %v919 = vsub.s32 %v916, %v918
        %v920 = vrot.slane %v906, %v919
        %v921 = vcombine.low %v889, %v904
        %v922 = vcombine.high %v889, %v904
        %v924 = vunpack.c.l.s4 1934713408
        %v925 = vunpack.c.0.s8 %v924
        %v926 = vlaneseq
        %v927 = vshrl.u32 %v926, 7
        %v928 = vsub.s32 %v925, %v927
        %v929 = vrot.slane %v921, %v928
        %v931 = vunpack.c.l.s4 1934713408
        %v932 = vunpack.c.0.s8 %v931
        %v933 = vlaneseq
        %v934 = vshrl.u32 %v933, 7
        %v935 = vsub.s32 %v932, %v934
        %v936 = vrot.slane %v922, %v935
        %v937 = vcombine.high %v913, 0.0
        %v938 = vcombine.high %v920, 0.0
        %v939 = vcombine.high %v929, 0.0
        %v940 = vcombine.high %v936, 0.0
        %v941 = vcombine.low %v913, %v920
        %v943 = vunpack.c.l.s4 1983009808
        %v944 = vunpack.c.0.s8 %v943
        %v945 = vlaneseq
        %v946 = vshrl.u32 %v945, 7
        %v947 = vsub.s32 %v944, %v946
        %v948 = vrot.slane %v941, %v947
        %v949 = vcombine.low %v937, %v938
        %v951 = vunpack.c.l.s4 1983009808
        %v952 = vunpack.c.0.s8 %v951
        %v953 = vlaneseq
        %v954 = vshrl.u32 %v953, 7
        %v955 = vsub.s32 %v952, %v954
        %v956 = vrot.slane %v949, %v955
        %v957 = vcombine.low %v929, %v936
        %v959 = vunpack.c.l.s4 1983009808
        %v960 = vunpack.c.0.s8 %v959
        %v961 = vlaneseq
        %v962 = vshrl.u32 %v961, 7
        %v963 = vsub.s32 %v960, %v962
        %v964 = vrot.slane %v957, %v963
        %v965 = vcombine.low %v939, %v940
        %v967 = vunpack.c.l.s4 1983009808
        %v968 = vunpack.c.0.s8 %v967
        %v969 = vlaneseq
        %v970 = vshrl.u32 %v969, 7
        %v971 = vsub.s32 %v968, %v970
        %v972 = vrot.slane %v965, %v971
        %v973 = vcombine.low %v948, %v956
        %v975 = vunpack.c.l.s4 1934713408
        %v976 = vunpack.c.0.s8 %v975
        %v977 = vlaneseq
        %v978 = vshrl.u32 %v977, 7
        %v979 = vsub.s32 %v976, %v978
        %v980 = vrot.slane %v973, %v979
        %v981 = vcombine.low %v964, %v972
        %v983 = vunpack.c.l.s4 1934713408
        %v984 = vunpack.c.0.s8 %v983
        %v985 = vlaneseq
        %v986 = vshrl.u32 %v985, 7
        %v987 = vsub.s32 %v984, %v986
        %v988 = vrot.slane %v981, %v987
        %v989 = vcombine.low %v980, %v988
        %v990 = vcombine.high %v980, %v988
        %v991 = vpack.c.bf16 %v989, %v989
        %v992 = vpack.c.bf16 %v990, %v990
        %993 = vrot.lane.b32.xlu0 %v742, 64
        %v994 = vpop.permute.xlu0 %993
        %995 = vrot.lane.b32.xlu0 %v749, 64
        %v996 = vpop.permute.xlu0 %995
        %v999 = vcombine.high %v994, 0.0
        %v1001 = vunpack.c.l.s4 1983009808
        %v1002 = vunpack.c.0.s8 %v1001
        %v1003 = vlaneseq
        %v1004 = vshrl.u32 %v1003, 7
        %v1005 = vsub.s32 %v1002, %v1004
        %v1006 = vrot.slane %v994, %v1005
        %v1008 = vunpack.c.l.s4 1983009808
        %v1009 = vunpack.c.0.s8 %v1008
        %v1010 = vlaneseq
        %v1011 = vshrl.u32 %v1010, 7
        %v1012 = vsub.s32 %v1009, %v1011
        %v1013 = vrot.slane %v999, %v1012
        %v1014 = vcombine.high %v996, 0.0
        %v1016 = vunpack.c.l.s4 1983009808
        %v1017 = vunpack.c.0.s8 %v1016
        %v1018 = vlaneseq
        %v1019 = vshrl.u32 %v1018, 7
        %v1020 = vsub.s32 %v1017, %v1019
        %v1021 = vrot.slane %v996, %v1020
        %v1023 = vunpack.c.l.s4 1983009808
        %v1024 = vunpack.c.0.s8 %v1023
        %v1025 = vlaneseq
        %v1026 = vshrl.u32 %v1025, 7
        %v1027 = vsub.s32 %v1024, %v1026
        %v1028 = vrot.slane %v1014, %v1027
        %v1029 = vcombine.low %v1006, %v1021
        %v1030 = vcombine.high %v1006, %v1021
        %v1032 = vunpack.c.l.s4 1934713408
        %v1033 = vunpack.c.0.s8 %v1032
        %v1034 = vlaneseq
        %v1035 = vshrl.u32 %v1034, 7
        %v1036 = vsub.s32 %v1033, %v1035
        %v1037 = vrot.slane %v1029, %v1036
        %v1039 = vunpack.c.l.s4 1934713408
        %v1040 = vunpack.c.0.s8 %v1039
        %v1041 = vlaneseq
        %v1042 = vshrl.u32 %v1041, 7
        %v1043 = vsub.s32 %v1040, %v1042
        %v1044 = vrot.slane %v1030, %v1043
        %v1045 = vcombine.low %v1013, %v1028
        %v1046 = vcombine.high %v1013, %v1028
        %v1048 = vunpack.c.l.s4 1934713408
        %v1049 = vunpack.c.0.s8 %v1048
        %v1050 = vlaneseq
        %v1051 = vshrl.u32 %v1050, 7
        %v1052 = vsub.s32 %v1049, %v1051
        %v1053 = vrot.slane %v1045, %v1052
        %v1055 = vunpack.c.l.s4 1934713408
        %v1056 = vunpack.c.0.s8 %v1055
        %v1057 = vlaneseq
        %v1058 = vshrl.u32 %v1057, 7
        %v1059 = vsub.s32 %v1056, %v1058
        %v1060 = vrot.slane %v1046, %v1059
        %v1061 = vcombine.high %v1037, 0.0
        %v1062 = vcombine.high %v1044, 0.0
        %v1063 = vcombine.high %v1053, 0.0
        %v1064 = vcombine.high %v1060, 0.0
        %v1065 = vcombine.low %v1037, %v1044
        %v1067 = vunpack.c.l.s4 1983009808
        %v1068 = vunpack.c.0.s8 %v1067
        %v1069 = vlaneseq
        %v1070 = vshrl.u32 %v1069, 7
        %v1071 = vsub.s32 %v1068, %v1070
        %v1072 = vrot.slane %v1065, %v1071
        %v1073 = vcombine.low %v1061, %v1062
        %v1075 = vunpack.c.l.s4 1983009808
        %v1076 = vunpack.c.0.s8 %v1075
        %v1077 = vlaneseq
        %v1078 = vshrl.u32 %v1077, 7
        %v1079 = vsub.s32 %v1076, %v1078
        %v1080 = vrot.slane %v1073, %v1079
        %v1081 = vcombine.low %v1053, %v1060
        %v1083 = vunpack.c.l.s4 1983009808
        %v1084 = vunpack.c.0.s8 %v1083
        %v1085 = vlaneseq
        %v1086 = vshrl.u32 %v1085, 7
        %v1087 = vsub.s32 %v1084, %v1086
        %v1088 = vrot.slane %v1081, %v1087
        %v1089 = vcombine.low %v1063, %v1064
        %v1091 = vunpack.c.l.s4 1983009808
        %v1092 = vunpack.c.0.s8 %v1091
        %v1093 = vlaneseq
        %v1094 = vshrl.u32 %v1093, 7
        %v1095 = vsub.s32 %v1092, %v1094
        %v1096 = vrot.slane %v1089, %v1095
        %v1097 = vcombine.low %v1072, %v1080
        %v1099 = vunpack.c.l.s4 1934713408
        %v1100 = vunpack.c.0.s8 %v1099
        %v1101 = vlaneseq
        %v1102 = vshrl.u32 %v1101, 7
        %v1103 = vsub.s32 %v1100, %v1102
        %v1104 = vrot.slane %v1097, %v1103
        %v1105 = vcombine.low %v1088, %v1096
        %v1107 = vunpack.c.l.s4 1934713408
        %v1108 = vunpack.c.0.s8 %v1107
        %v1109 = vlaneseq
        %v1110 = vshrl.u32 %v1109, 7
        %v1111 = vsub.s32 %v1108, %v1110
        %v1112 = vrot.slane %v1105, %v1111
        %v1113 = vcombine.low %v1104, %v1112
        %v1114 = vcombine.high %v1104, %v1112
        %v1115 = vpack.c.bf16 %v1113, %v1113
        %v1116 = vpack.c.bf16 %v1114, %v1114
        %vm1117 = vcmask 130048
        %v1119 = vsel %vm1117, %v867, 0
        %v1122 = vsel %vm1117, %v991, 0
        %1124 = vmatprep.subr.bf16.mxu0 0
        %1125 = vmatpush1.bf16.xpose.msra.mxu0 0
        %1126 = vmatprep.subr.bf16.mxu0 0
        %1127 = vmatpush1.bf16.xpose.msra.mxu0 0
        %1128 = vmatprep.subr.bf16.mxu0 0
        %1129 = vmatpush1.bf16.xpose.msra.mxu0 0
        %1130 = vmatprep.subr.bf16.mxu0 0
        %1131 = vmatpush1.bf16.xpose.msra.mxu0 0
        %1132 = vmatprep.subr.bf16.mxu0 0
        %1133 = vmatpush1.bf16.xpose.msra.mxu0 0
        %1134 = vmatprep.subr.bf16.mxu0 0
        %1135 = vmatpush1.bf16.xpose.msra.mxu0 0
        %1136 = vmatprep.subr.bf16.mxu0 0
        %1137 = vmatpush1.bf16.xpose.msra.mxu0 0
        %1138 = vmatprep.subr.bf16.mxu0 0
        %1139 = vmatpush1.bf16.xpose.msra.mxu0 %v1122
        %1140 = vmatprep.subr.bf16.mxu0 0
        %1141 = vmatpush2.bf16.xpose.msra.mxu0 0
        %1142 = vmatprep.subr.bf16.mxu0 0
        %1143 = vmatpush2.bf16.xpose.msra.mxu0 0
        %1144 = vmatprep.subr.bf16.mxu0 0
        %1145 = vmatpush2.bf16.xpose.msra.mxu0 0
        %1146 = vmatprep.subr.bf16.mxu0 0
        %1147 = vmatpush2.bf16.xpose.msra.mxu0 0
        %1148 = vmatprep.subr.bf16.mxu0 0
        %1149 = vmatpush2.bf16.xpose.msra.mxu0 0
        %1150 = vmatprep.subr.bf16.mxu0 0
        %1151 = vmatpush2.bf16.xpose.msra.mxu0 0
        %1152 = vmatprep.subr.bf16.mxu0 0
        %1153 = vmatpush2.bf16.xpose.msra.mxu0 0
        %1154 = vmatprep.subr.bf16.mxu0 0
        %1155 = vmatpush2.bf16.xpose.msra.mxu0 0
        %1156 = vmatprep.mubr.bf16.mxu0 0
        %1157 = vmatmul.mubr.bf16.gmra.mxu0 %v1119
        %v1158 = vpop.f32.mrf.mxu0
        %v1159 = vadd.f32 0.0, %v1158
        %v1160 = vpop.f32.mrf.mxu0
        %v1161 = vpop.f32.mrf.mxu0
        %v1162 = vpop.f32.mrf.mxu0
        %1163 = vdwg.mxu0
        %v1165 = vsel %vm1117, %v868, 0
        %v1168 = vsel %vm1117, %v992, 0
        %1170 = vmatprep.subr.bf16.mxu0 0
        %1171 = vmatpush1.bf16.xpose.msra.mxu0 0
        %1172 = vmatprep.subr.bf16.mxu0 0
        %1173 = vmatpush1.bf16.xpose.msra.mxu0 0
        %1174 = vmatprep.subr.bf16.mxu0 0
        %1175 = vmatpush1.bf16.xpose.msra.mxu0 0
        %1176 = vmatprep.subr.bf16.mxu0 0
        %1177 = vmatpush1.bf16.xpose.msra.mxu0 0
        %1178 = vmatprep.subr.bf16.mxu0 0
        %1179 = vmatpush1.bf16.xpose.msra.mxu0 0
        %1180 = vmatprep.subr.bf16.mxu0 0
        %1181 = vmatpush1.bf16.xpose.msra.mxu0 0
        %1182 = vmatprep.subr.bf16.mxu0 0
        %1183 = vmatpush1.bf16.xpose.msra.mxu0 0
        %1184 = vmatprep.subr.bf16.mxu0 0
        %1185 = vmatpush1.bf16.xpose.msra.mxu0 %v1168
        %1186 = vmatprep.subr.bf16.mxu0 0
        %1187 = vmatpush2.bf16.xpose.msra.mxu0 0
        %1188 = vmatprep.subr.bf16.mxu0 0
        %1189 = vmatpush2.bf16.xpose.msra.mxu0 0
        %1190 = vmatprep.subr.bf16.mxu0 0
        %1191 = vmatpush2.bf16.xpose.msra.mxu0 0
        %1192 = vmatprep.subr.bf16.mxu0 0
        %1193 = vmatpush2.bf16.xpose.msra.mxu0 0
        %1194 = vmatprep.subr.bf16.mxu0 0
        %1195 = vmatpush2.bf16.xpose.msra.mxu0 0
        %1196 = vmatprep.subr.bf16.mxu0 0
        %1197 = vmatpush2.bf16.xpose.msra.mxu0 0
        %1198 = vmatprep.subr.bf16.mxu0 0
        %1199 = vmatpush2.bf16.xpose.msra.mxu0 0
        %1200 = vmatprep.subr.bf16.mxu0 0
        %1201 = vmatpush2.bf16.xpose.msra.mxu0 0
        %1202 = vmatprep.mubr.bf16.mxu0 0
        %1203 = vmatmul.mubr.bf16.gmra.mxu0 %v1165
        %v1204 = vpop.f32.mrf.mxu0
        %v1205 = vadd.f32 0.0, %v1204
        %v1206 = vpop.f32.mrf.mxu0
        %v1207 = vpop.f32.mrf.mxu0
        %v1208 = vpop.f32.mrf.mxu0
        %1209 = vdwg.mxu0
        %v1210 = vlaneseq
        %v1211 = vshrl.u32 %v1210, 7
        %v1212 = vlaneseq
        %v1213 = vand.u32 %v1212, 127
        %vm1214 = vcmp.ge.s32.totalorder %v1211, %v1213
        %v1215 = vsel %vm1214, 1, 0
        %vm1216 = vcmp.eq.s32.totalorder %v1215, 1
        %v1217 = vsel %vm1216, %v1159, -inf
        %v1218 = vsel %vm1216, %v1205, -inf
        %vm1219 = vcmask 64512
        %v1220 = vsel %vm1219, %v1217, -inf
        %1221 = vmax.xlane.f32.xlu0 %v1220
        %v1222 = vpop.xlane.xlu0 %1221
        %v1223 = vsel %vm1219, %v1218, -inf
        %1224 = vmax.xlane.f32.xlu0 %v1223
        %v1225 = vpop.xlane.xlu0 %1224
        %v1226 = vsub.f32 %v1217, %v1222
        %v1227 = vsub.f32 %v1218, %v1225
        %v1228 = vmul.f32 %v1226, 1.442695
        %v1229 = vpow.pop %v1228
        %v1230 = vmul.f32 %v1227, 1.442695
        %v1231 = vpow.pop %v1230
        %v1232 = vsel %vm1219, %v1229, 0.0
        %1233 = vadd.xlane.f32.xlu0 %v1232
        %v1234 = vpop.xlane.xlu0 %1233
        %v1235 = vsel %vm1219, %v1231, 0.0
        %1236 = vadd.xlane.f32.xlu0 %v1235
        %v1237 = vpop.xlane.xlu0 %1236
        %v1238 = vrcp.pop %v1234
        %v1239 = vrcp.pop %v1237
        %v1240 = vmul.f32 %v1229, %v1238
        %v1241 = vmul.f32 %v1231, %v1239
        %v1242 = vpack.c.bf16 %v1240, %v1240
        %v1243 = vpack.c.bf16 %v1241, %v1241
        %v1245 = vsel %vm1219, %v1242, 0
        %vm1247 = vcmask 1043456
        %v1249 = vsel %vm1247, %v1115, 0
        %1251 = vmatprep.subr.bf16.mxu0 0
        %1252 = vmatpush1.bf16.msra.mxu0 0
        %1253 = vmatprep.subr.bf16.mxu0 0
        %1254 = vmatpush1.bf16.msra.mxu0 0
        %1255 = vmatprep.subr.bf16.mxu0 0
        %1256 = vmatpush1.bf16.msra.mxu0 0
        %1257 = vmatprep.subr.bf16.mxu0 0
        %1258 = vmatpush1.bf16.msra.mxu0 0
        %1259 = vmatprep.subr.bf16.mxu0 0
        %1260 = vmatpush1.bf16.msra.mxu0 0
        %1261 = vmatprep.subr.bf16.mxu0 0
        %1262 = vmatpush1.bf16.msra.mxu0 0
        %1263 = vmatprep.subr.bf16.mxu0 0
        %1264 = vmatpush1.bf16.msra.mxu0 0
        %1265 = vmatprep.subr.bf16.mxu0 0
        %1266 = vmatpush1.bf16.msra.mxu0 %v1249
        %1267 = vmatprep.subr.bf16.mxu0 0
        %1268 = vmatpush2.bf16.msra.mxu0 0
        %1269 = vmatprep.subr.bf16.mxu0 0
        %1270 = vmatpush2.bf16.msra.mxu0 0
        %1271 = vmatprep.subr.bf16.mxu0 0
        %1272 = vmatpush2.bf16.msra.mxu0 0
        %1273 = vmatprep.subr.bf16.mxu0 0
        %1274 = vmatpush2.bf16.msra.mxu0 0
        %1275 = vmatprep.subr.bf16.mxu0 0
        %1276 = vmatpush2.bf16.msra.mxu0 0
        %1277 = vmatprep.subr.bf16.mxu0 0
        %1278 = vmatpush2.bf16.msra.mxu0 0
        %1279 = vmatprep.subr.bf16.mxu0 0
        %1280 = vmatpush2.bf16.msra.mxu0 0
        %1281 = vmatprep.subr.bf16.mxu0 0
        %1282 = vmatpush2.bf16.msra.mxu0 0
        %1283 = vmatprep.mubr.bf16.mxu0 0
        %1284 = vmatmul.mubr.bf16.gmra.mxu0 %v1245
        %v1285 = vpop.f32.mrf.mxu0
        %v1286 = vadd.f32 0.0, %v1285
        %v1287 = vpop.f32.mrf.mxu0
        %v1288 = vpop.f32.mrf.mxu0
        %v1289 = vpop.f32.mrf.mxu0
        %1290 = vdwg.mxu0
        %v1292 = vsel %vm1219, %v1243, 0
        %v1295 = vsel %vm1247, %v1116, 0
        %1297 = vmatprep.subr.bf16.mxu0 0
        %1298 = vmatpush1.bf16.msra.mxu0 0
        %1299 = vmatprep.subr.bf16.mxu0 0
        %1300 = vmatpush1.bf16.msra.mxu0 0
        %1301 = vmatprep.subr.bf16.mxu0 0
        %1302 = vmatpush1.bf16.msra.mxu0 0
        %1303 = vmatprep.subr.bf16.mxu0 0
        %1304 = vmatpush1.bf16.msra.mxu0 0
        %1305 = vmatprep.subr.bf16.mxu0 0
        %1306 = vmatpush1.bf16.msra.mxu0 0
        %1307 = vmatprep.subr.bf16.mxu0 0
        %1308 = vmatpush1.bf16.msra.mxu0 0
        %1309 = vmatprep.subr.bf16.mxu0 0
        %1310 = vmatpush1.bf16.msra.mxu0 0
        %1311 = vmatprep.subr.bf16.mxu0 0
        %1312 = vmatpush1.bf16.msra.mxu0 %v1295
        %1313 = vmatprep.subr.bf16.mxu0 0
        %1314 = vmatpush2.bf16.msra.mxu0 0
        %1315 = vmatprep.subr.bf16.mxu0 0
        %1316 = vmatpush2.bf16.msra.mxu0 0
        %1317 = vmatprep.subr.bf16.mxu0 0
        %1318 = vmatpush2.bf16.msra.mxu0 0
        %1319 = vmatprep.subr.bf16.mxu0 0
        %1320 = vmatpush2.bf16.msra.mxu0 0
        %1321 = vmatprep.subr.bf16.mxu0 0
        %1322 = vmatpush2.bf16.msra.mxu0 0
        %1323 = vmatprep.subr.bf16.mxu0 0
        %1324 = vmatpush2.bf16.msra.mxu0 0
        %1325 = vmatprep.subr.bf16.mxu0 0
        %1326 = vmatpush2.bf16.msra.mxu0 0
        %1327 = vmatprep.subr.bf16.mxu0 0
        %1328 = vmatpush2.bf16.msra.mxu0 0
        %1329 = vmatprep.mubr.bf16.mxu0 0
        %1330 = vmatmul.mubr.bf16.gmra.mxu0 %v1292
        %v1331 = vpop.f32.mrf.mxu0
        %v1332 = vadd.f32 0.0, %v1331
        %v1333 = vpop.f32.mrf.mxu0
        %v1334 = vpop.f32.mrf.mxu0
        %v1335 = vpop.f32.mrf.mxu0
        %1336 = vdwg.mxu0
        %v1337 = vcombine.high %v1286, 0.0
        %v1339 = vunpack.c.l.s4 1983009808
        %v1340 = vunpack.c.0.s8 %v1339
        %v1341 = vlaneseq
        %v1342 = vshrl.u32 %v1341, 7
        %v1343 = vsub.s32 %v1340, %v1342
        %v1344 = vrot.slane %v1286, %v1343
        %v1346 = vunpack.c.l.s4 1983009808
        %v1347 = vunpack.c.0.s8 %v1346
        %v1348 = vlaneseq
        %v1349 = vshrl.u32 %v1348, 7
        %v1350 = vsub.s32 %v1347, %v1349
        %v1351 = vrot.slane %v1337, %v1350
        %v1352 = vcombine.high %v1332, 0.0
        %v1354 = vunpack.c.l.s4 1983009808
        %v1355 = vunpack.c.0.s8 %v1354
        %v1356 = vlaneseq
        %v1357 = vshrl.u32 %v1356, 7
        %v1358 = vsub.s32 %v1355, %v1357
        %v1359 = vrot.slane %v1332, %v1358
        %v1361 = vunpack.c.l.s4 1983009808
        %v1362 = vunpack.c.0.s8 %v1361
        %v1363 = vlaneseq
        %v1364 = vshrl.u32 %v1363, 7
        %v1365 = vsub.s32 %v1362, %v1364
        %v1366 = vrot.slane %v1352, %v1365
        %v1367 = vcombine.low %v1344, %v1359
        %v1368 = vcombine.high %v1344, %v1359
        %v1370 = vunpack.c.l.s4 1934713408
        %v1371 = vunpack.c.0.s8 %v1370
        %v1372 = vlaneseq
        %v1373 = vshrl.u32 %v1372, 7
        %v1374 = vsub.s32 %v1371, %v1373
        %v1375 = vrot.slane %v1367, %v1374
        %v1377 = vunpack.c.l.s4 1934713408
        %v1378 = vunpack.c.0.s8 %v1377
        %v1379 = vlaneseq
        %v1380 = vshrl.u32 %v1379, 7
        %v1381 = vsub.s32 %v1378, %v1380
        %v1382 = vrot.slane %v1368, %v1381
        %v1383 = vcombine.low %v1351, %v1366
        %v1384 = vcombine.high %v1351, %v1366
        %v1386 = vunpack.c.l.s4 1934713408
        %v1387 = vunpack.c.0.s8 %v1386
        %v1388 = vlaneseq
        %v1389 = vshrl.u32 %v1388, 7
        %v1390 = vsub.s32 %v1387, %v1389
        %v1391 = vrot.slane %v1383, %v1390
        %v1393 = vunpack.c.l.s4 1934713408
        %v1394 = vunpack.c.0.s8 %v1393
        %v1395 = vlaneseq
        %v1396 = vshrl.u32 %v1395, 7
        %v1397 = vsub.s32 %v1394, %v1396
        %v1398 = vrot.slane %v1384, %v1397
        %v1399 = vcombine.high %v1375, 0.0
        %v1400 = vcombine.high %v1382, 0.0
        %v1401 = vcombine.high %v1391, 0.0
        %v1402 = vcombine.high %v1398, 0.0
        %v1403 = vcombine.low %v1375, %v1382
        %v1405 = vunpack.c.l.s4 1983009808
        %v1406 = vunpack.c.0.s8 %v1405
        %v1407 = vlaneseq
        %v1408 = vshrl.u32 %v1407, 7
        %v1409 = vsub.s32 %v1406, %v1408
        %v1410 = vrot.slane %v1403, %v1409
        %v1411 = vcombine.low %v1399, %v1400
        %v1413 = vunpack.c.l.s4 1983009808
        %v1414 = vunpack.c.0.s8 %v1413
        %v1415 = vlaneseq
        %v1416 = vshrl.u32 %v1415, 7
        %v1417 = vsub.s32 %v1414, %v1416
        %v1418 = vrot.slane %v1411, %v1417
        %v1419 = vcombine.low %v1391, %v1398
        %v1421 = vunpack.c.l.s4 1983009808
        %v1422 = vunpack.c.0.s8 %v1421
        %v1423 = vlaneseq
        %v1424 = vshrl.u32 %v1423, 7
        %v1425 = vsub.s32 %v1422, %v1424
        %v1426 = vrot.slane %v1419, %v1425
        %v1427 = vcombine.low %v1401, %v1402
        %v1429 = vunpack.c.l.s4 1983009808
        %v1430 = vunpack.c.0.s8 %v1429
        %v1431 = vlaneseq
        %v1432 = vshrl.u32 %v1431, 7
        %v1433 = vsub.s32 %v1430, %v1432
        %v1434 = vrot.slane %v1427, %v1433
        %v1435 = vcombine.low %v1410, %v1418
        %v1437 = vunpack.c.l.s4 1934713408
        %v1438 = vunpack.c.0.s8 %v1437
        %v1439 = vlaneseq
        %v1440 = vshrl.u32 %v1439, 7
        %v1441 = vsub.s32 %v1438, %v1440
        %v1442 = vrot.slane %v1435, %v1441
        %v1443 = vcombine.low %v1426, %v1434
        %v1445 = vunpack.c.l.s4 1934713408
        %v1446 = vunpack.c.0.s8 %v1445
        %v1447 = vlaneseq
        %v1448 = vshrl.u32 %v1447, 7
        %v1449 = vsub.s32 %v1446, %v1448
        %v1450 = vrot.slane %v1443, %v1449
        %v1451 = vcombine.low %v1442, %v1450
        %v1452 = vcombine.high %v1442, %v1450
        %1454 = vrot.lane.b32.xlu0 %v1452, 16
        %v1455 = vpop.permute.xlu0 %1454
        %v1457 = vsel %vm1117, %v1451, %v1455
        %v1458 = vpack.c.bf16 %v1457, %v1457
        %v1459 = vld [vmem:[%s614] sm:$0xf]
        %v1460 = vld [vmem:[%s614 + $0x4] sm:$0xf]
        %v1461 = vld [vmem:[%s614 + $0x8] sm:$0xf]
        %v1462 = vld [vmem:[%s614 + $0xc] sm:$0xf]
        %v1463 = vld [vmem:[%s617] sm:$0x1]
        %v1465 = vlaneseq
        %v1466 = vshrl.u32 %v1465, 7
        %v1467 = vsub.s32 0, %v1466
        %v1468 = vrot.slane %v1463, %v1467
        %v1474 = vunpack.c.l.b16 %v1459
        %v1475 = vunpack.c.l.b16 %v1460
        %v1476 = vunpack.c.l.b16 %v1461
        %v1477 = vunpack.c.l.b16 %v1462
        %v1478 = vpack.c.b16 %v1475, %v1474
        %v1479 = vpack.c.b16 %v1477, %v1476
        %v1483 = vsel %vm651, %v1458, 0
        %1485 = vmatprep.subr.bf16.mxu0 0
        %1486 = vmatpush1.bf16.msra.mxu0 0
        %1487 = vmatprep.subr.bf16.mxu0 0
        %1488 = vmatpush1.bf16.msra.mxu0 0
        %1489 = vmatprep.subr.bf16.mxu0 0
        %1490 = vmatpush1.bf16.msra.mxu0 0
        %1491 = vmatprep.subr.bf16.mxu0 0
        %1492 = vmatpush1.bf16.msra.mxu0 0
        %1493 = vmatprep.subr.bf16.mxu0 0
        %1494 = vmatpush1.bf16.msra.mxu0 0
        %1495 = vmatprep.subr.bf16.mxu0 0
        %1496 = vmatpush1.bf16.msra.mxu0 0
        %1497 = vmatprep.subr.bf16.mxu0 0
        %1498 = vmatpush1.bf16.msra.mxu0 %v1479
        %1499 = vmatprep.subr.bf16.mxu0 0
        %1500 = vmatpush1.bf16.msra.mxu0 %v1478
        %1501 = vmatprep.subr.bf16.mxu0 0
        %1502 = vmatpush2.bf16.msra.mxu0 0
        %1503 = vmatprep.subr.bf16.mxu0 0
        %1504 = vmatpush2.bf16.msra.mxu0 0
        %1505 = vmatprep.subr.bf16.mxu0 0
        %1506 = vmatpush2.bf16.msra.mxu0 0
        %1507 = vmatprep.subr.bf16.mxu0 0
        %1508 = vmatpush2.bf16.msra.mxu0 0
        %1509 = vmatprep.subr.bf16.mxu0 0
        %1510 = vmatpush2.bf16.msra.mxu0 0
        %1511 = vmatprep.subr.bf16.mxu0 0
        %1512 = vmatpush2.bf16.msra.mxu0 0
        %1513 = vmatprep.subr.bf16.mxu0 0
        %1514 = vmatpush2.bf16.msra.mxu0 0
        %1515 = vmatprep.subr.bf16.mxu0 0
        %1516 = vmatpush2.bf16.msra.mxu0 0
        %1517 = vmatprep.mubr.bf16.mxu0 0
        %1518 = vmatmul.mubr.bf16.gmra.mxu0 %v1483
        %v1519 = vpop.f32.mrf.mxu0
        %v1520 = vadd.f32 %v1468, %v1519
        %v1521 = vpop.f32.mrf.mxu0
        %v1522 = vpop.f32.mrf.mxu0
        %v1523 = vpop.f32.mrf.mxu0
        %1524 = vdwg.mxu0
        %v1525 = vadd.f32 %v648, %v1520
        %v1526 = vld [vmem:[%s620] sm:$0x1]
        %v1527 = vld [vmem:[%s623] sm:$0x1]
        %v1528 = vsel %vm651, %v1525, 0.0
        %1529 = vadd.xlane.f32.xlu0 %v1528
        %v1530 = vpop.xlane.xlu0 %1529
        %v1531 = vmul.f32 %v1530, %v655
        %v1532 = vsub.f32 %v1525, %v1531
        %v1533 = vmul.f32 %v1532, %v1532
        %v1534 = vsel %vm651, %v1533, 0.0
        %1535 = vadd.xlane.f32.xlu0 %v1534
        %v1536 = vpop.xlane.xlu0 %1535
        %v1537 = vmul.f32 %v1536, %v655
        %v1538 = vadd.f32 %v1537, 1e-05
        %v1539 = vrsqrt.pop %v1538
        %v1540 = vmul.f32 %v1532, %v1539
        %v1542 = vlaneseq
        %v1543 = vshrl.u32 %v1542, 7
        %v1544 = vsub.s32 0, %v1543
        %v1545 = vrot.slane %v1526, %v1544
        %v1547 = vmul.f32 %v1540, %v1545
        %v1549 = vlaneseq
        %v1550 = vshrl.u32 %v1549, 7
        %v1551 = vsub.s32 0, %v1550
        %v1552 = vrot.slane %v1527, %v1551
        %v1554 = vadd.f32 %v1547, %v1552
        %v1555 = vpack.c.bf16 %v1554, %v1554
        %v1556 = vld [vmem:[%s628] sm:$0xf]
        %v1557 = vld [vmem:[%s628 + $0x4] sm:$0xf]
        %v1558 = vld [vmem:[%s628 + $0x8] sm:$0xf]
        %v1559 = vld [vmem:[%s628 + $0xc] sm:$0xf]
        %v1560 = vld [vmem:[%s631] sm:$0x1]
        %v1562 = vlaneseq
        %v1563 = vshrl.u32 %v1562, 7
        %v1564 = vsub.s32 0, %v1563
        %v1565 = vrot.slane %v1560, %v1564
        %v1571 = vunpack.c.l.b16 %v1556
        %v1572 = vunpack.c.l.b16 %v1557
        %v1573 = vunpack.c.l.b16 %v1558
        %v1574 = vunpack.c.l.b16 %v1559
        %v1575 = vpack.c.b16 %v1572, %v1571
        %v1576 = vpack.c.b16 %v1574, %v1573
        %v1580 = vsel %vm651, %v1555, 0
        %1582 = vmatprep.subr.bf16.mxu0 0
        %1583 = vmatpush1.bf16.msra.mxu0 0
        %1584 = vmatprep.subr.bf16.mxu0 0
        %1585 = vmatpush1.bf16.msra.mxu0 0
        %1586 = vmatprep.subr.bf16.mxu0 0
        %1587 = vmatpush1.bf16.msra.mxu0 0
        %1588 = vmatprep.subr.bf16.mxu0 0
        %1589 = vmatpush1.bf16.msra.mxu0 0
        %1590 = vmatprep.subr.bf16.mxu0 0
        %1591 = vmatpush1.bf16.msra.mxu0 0
        %1592 = vmatprep.subr.bf16.mxu0 0
        %1593 = vmatpush1.bf16.msra.mxu0 0
        %1594 = vmatprep.subr.bf16.mxu0 0
        %1595 = vmatpush1.bf16.msra.mxu0 %v1576
        %1596 = vmatprep.subr.bf16.mxu0 0
        %1597 = vmatpush1.bf16.msra.mxu0 %v1575
        %1598 = vmatprep.subr.bf16.mxu0 0
        %1599 = vmatpush2.bf16.msra.mxu0 0
        %1600 = vmatprep.subr.bf16.mxu0 0
        %1601 = vmatpush2.bf16.msra.mxu0 0
        %1602 = vmatprep.subr.bf16.mxu0 0
        %1603 = vmatpush2.bf16.msra.mxu0 0
        %1604 = vmatprep.subr.bf16.mxu0 0
        %1605 = vmatpush2.bf16.msra.mxu0 0
        %1606 = vmatprep.subr.bf16.mxu0 0
        %1607 = vmatpush2.bf16.msra.mxu0 0
        %1608 = vmatprep.subr.bf16.mxu0 0
        %1609 = vmatpush2.bf16.msra.mxu0 0
        %1610 = vmatprep.subr.bf16.mxu0 0
        %1611 = vmatpush2.bf16.msra.mxu0 0
        %1612 = vmatprep.subr.bf16.mxu0 0
        %1613 = vmatpush2.bf16.msra.mxu0 0
        %1614 = vmatprep.mubr.bf16.mxu0 0
        %1615 = vmatmul.mubr.bf16.gmra.mxu0 %v1580
        %v1616 = vpop.f32.mrf.mxu0
        %v1617 = vadd.f32 %v1565, %v1616
        %v1618 = vpop.f32.mrf.mxu0
        %v1619 = vpop.f32.mrf.mxu0
        %v1620 = vpop.f32.mrf.mxu0
        %1621 = vdwg.mxu0
        %v1622 = vmul.f32 %v1617, 0.5
        %v1623 = vmul.f32 %v1617, 0.70710677
        %v1624 = verf.f32.pop %v1623
        %v1625 = vadd.f32 %v1624, 1.0
        %v1626 = vmul.f32 %v1622, %v1625
        %v1627 = vpack.c.bf16 %v1626, %v1626
        %v1628 = vld [vmem:[%s636] sm:$0xf]
        %v1629 = vld [vmem:[%s636 + $0x4] sm:$0xf]
        %v1630 = vld [vmem:[%s636 + $0x8] sm:$0xf]
        %v1631 = vld [vmem:[%s636 + $0xc] sm:$0xf]
        %v1632 = vld [vmem:[%s636 + $0x10] sm:$0xf]
        %v1633 = vld [vmem:[%s636 + $0x14] sm:$0xf]
        %v1634 = vld [vmem:[%s636 + $0x18] sm:$0xf]
        %v1635 = vld [vmem:[%s636 + $0x1c] sm:$0xf]
        %v1636 = vld [vmem:[%s636 + $0x20] sm:$0xf]
        %v1637 = vld [vmem:[%s636 + $0x24] sm:$0xf]
        %v1638 = vld [vmem:[%s636 + $0x28] sm:$0xf]
        %v1639 = vld [vmem:[%s636 + $0x2c] sm:$0xf]
        %v1640 = vld [vmem:[%s636 + $0x30] sm:$0xf]
        %v1641 = vld [vmem:[%s636 + $0x34] sm:$0xf]
        %v1642 = vld [vmem:[%s636 + $0x38] sm:$0xf]
        %v1643 = vld [vmem:[%s636 + $0x3c] sm:$0xf]
        %v1660 = vunpack.c.l.b16 %v1628
        %v1661 = vunpack.c.l.b16 %v1629
        %v1662 = vunpack.c.l.b16 %v1630
        %v1663 = vunpack.c.l.b16 %v1631
        %v1664 = vunpack.c.l.b16 %v1632
        %v1665 = vunpack.c.l.b16 %v1633
        %v1666 = vunpack.c.l.b16 %v1634
        %v1667 = vunpack.c.l.b16 %v1635
        %v1668 = vunpack.c.l.b16 %v1636
        %v1669 = vunpack.c.l.b16 %v1637
        %v1670 = vunpack.c.l.b16 %v1638
        %v1671 = vunpack.c.l.b16 %v1639
        %v1672 = vunpack.c.l.b16 %v1640
        %v1673 = vunpack.c.l.b16 %v1641
        %v1674 = vunpack.c.l.b16 %v1642
        %v1675 = vunpack.c.l.b16 %v1643
        %v1676 = vpack.c.b16 %v1661, %v1660
        %v1677 = vpack.c.b16 %v1663, %v1662
        %v1678 = vpack.c.b16 %v1665, %v1664
        %v1679 = vpack.c.b16 %v1667, %v1666
        %v1680 = vpack.c.b16 %v1669, %v1668
        %v1681 = vpack.c.b16 %v1671, %v1670
        %v1682 = vpack.c.b16 %v1673, %v1672
        %v1683 = vpack.c.b16 %v1675, %v1674
        %1692 = vmatprep.subr.bf16.mxu0 0
        %1693 = vmatpush1.bf16.msra.mxu0 %v1683
        %1694 = vmatprep.subr.bf16.mxu0 0
        %1695 = vmatpush1.bf16.msra.mxu0 %v1682
        %1696 = vmatprep.subr.bf16.mxu0 0
        %1697 = vmatpush1.bf16.msra.mxu0 %v1681
        %1698 = vmatprep.subr.bf16.mxu0 0
        %1699 = vmatpush1.bf16.msra.mxu0 %v1680
        %1700 = vmatprep.subr.bf16.mxu0 0
        %1701 = vmatpush1.bf16.msra.mxu0 %v1679
        %1702 = vmatprep.subr.bf16.mxu0 0
        %1703 = vmatpush1.bf16.msra.mxu0 %v1678
        %1704 = vmatprep.subr.bf16.mxu0 0
        %1705 = vmatpush1.bf16.msra.mxu0 %v1677
        %1706 = vmatprep.subr.bf16.mxu0 0
        %1707 = vmatpush1.bf16.msra.mxu0 %v1676
        %1708 = vmatprep.subr.bf16.mxu0 0
        %1709 = vmatpush2.bf16.msra.mxu0 0
        %1710 = vmatprep.subr.bf16.mxu0 0
        %1711 = vmatpush2.bf16.msra.mxu0 0
        %1712 = vmatprep.subr.bf16.mxu0 0
        %1713 = vmatpush2.bf16.msra.mxu0 0
        %1714 = vmatprep.subr.bf16.mxu0 0
        %1715 = vmatpush2.bf16.msra.mxu0 0
        %1716 = vmatprep.subr.bf16.mxu0 0
        %1717 = vmatpush2.bf16.msra.mxu0 0
        %1718 = vmatprep.subr.bf16.mxu0 0
        %1719 = vmatpush2.bf16.msra.mxu0 0
        %1720 = vmatprep.subr.bf16.mxu0 0
        %1721 = vmatpush2.bf16.msra.mxu0 0
        %1722 = vmatprep.subr.bf16.mxu0 0
        %1723 = vmatpush2.bf16.msra.mxu0 0
        %1724 = vmatprep.mubr.bf16.mxu0 0
        %1725 = vmatmul.mubr.bf16.gmra.mxu0 %v1627
        %v1726 = vpop.f32.mrf.mxu0
        %v1727 = vadd.f32 0.0, %v1726
        %v1728 = vpop.f32.mrf.mxu0
        %v1729 = vpop.f32.mrf.mxu0
        %v1730 = vpop.f32.mrf.mxu0
        %1731 = vdwg.mxu0
        %v1732 = vadd.f32 %v1525, %v1727
        %v1733 = vld [vmem:[%s639] sm:$0x1]
        %v1735 = vlaneseq
        %v1736 = vshrl.u32 %v1735, 7
        %v1737 = vsub.s32 0, %v1736
        %v1738 = vrot.slane %v1733, %v1737
        %v1740 = vadd.f32 %v1732, %v1738
        %1741 = vst.msk [vmem:[#allocation2] sm:$0xff] %vm651, %v1740
        %p1742 = scmp.eq.s32.totalorder %s32, 1
        // Predicated region
        $region77: #{tpu_custom_call.1} parent=71 // pred_check
          %p1743 = pneg %p1742
        $region78: #{tpu_custom_call.1} parent=71 // pred_check_branch
          %1745 = sbr.rel (%p1743) target = $region80
        $region79: #{tpu_custom_call.1} parent=71 // pred_region
          %1746 = vst.msk [vmem:[%s591] sm:$0xff] %vm651, %v1740
        $region80: #{tpu_custom_call.1} parent=71 // pred_fallthru
          _
        %s1747 = sand.u32 %s385, 1
        %s1748 = scalar_lea.sflag [#allocation4], %s1747
        %s1749 = sand.u32 %s385, 1
        %s1750 = smul.addr %s1749, 8
        %s1751 = scalar_lea.vmem [#allocation3], %s1750
        // Predicated region
        $region81: #{tpu_custom_call.1} parent=71 // pred_check
          %p1752 = pneg %p395
        $region82: #{tpu_custom_call.1} parent=71 // pred_check_branch
          %1754 = sbr.rel (%p1752) target = $region84
        $region83: #{tpu_custom_call.1} parent=71 // pred_region
          %s1756 = ssub.s32 128, 128
          %1757 = vsyncadd %s1748, %s1756
          %s1758 = smul.addr %s31, 128
          %s1759 = scalar_lea.hbm %s13, %s1758
          %s1761 = sshll.u32 %s1751, 4
          %s1762 = int_to_ptr.vmem [resolvable:$true] %s1761
          %1764 = dma.vmem_to_hbm [thread:$0]  %s1762, 128, %s1759, %s1748
        $region84: #{tpu_custom_call.1} parent=71 // pred_fallthru
          _
      $region72: #{tpu_custom_call.1} parent=5 // pred_fallthru
        _
      %p1765 = scmp.le.s32.totalorder 2, %s22
      // Predicated region
      $region85: #{tpu_custom_call.1} parent=5 // pred_check
        %p1766 = pneg %p1765
      $region86: #{tpu_custom_call.1} parent=5 // pred_check_branch
        %1768 = sbr.rel (%p1766) target = $region88
      $region87: #{tpu_custom_call.1} parent=5 // pred_region
        %s1769 = ssub.s32 %s22, 2
        // Predicated region
        $region89: #{tpu_custom_call.1} parent=87 // pred_check
          %p1770 = pneg %p401
        $region90: #{tpu_custom_call.1} parent=87 // pred_check_branch
          %1772 = sbr.rel (%p1770) target = $region92
        $region91: #{tpu_custom_call.1} parent=87 // pred_region
          %s1773 = sand.u32 %s386, 1
          %s1774 = scalar_lea.sflag [#allocation4], %s1773
          %s1775 = sand.u32 %s386, 1
          %s1776 = smul.addr %s1775, 8
          %s1777 = scalar_lea.vmem [#allocation3], %s1776
          %1778 = dma.done %s1774, 128
        $region92: #{tpu_custom_call.1} parent=87 // pred_fallthru
          _
      $region88: #{tpu_custom_call.1} parent=5 // pred_fallthru
        _
    $region6: #{tpu_custom_call.1} parent=1 // loop_footer
      %s26 = sadd.s32 1, %s22
    $region7: #{tpu_custom_call.1} parent=1 // loop_footer_branch
      %21 = sbr.rel target = $region3
    $region8: #{tpu_custom_call.1} parent=1 // loop_exit
      _
    %1779 = vsyncpa [#allocation4], 1
    %s1780 = scalar_lea.sflag [#allocation4], 1
    %1781 = vsyncpa %s1780, 1

</llo_original>
